<compile_context>
chip_gen: v5e
topology: v5e:2x2
jax: 0.10.0
libtpu: 0.0.40
codegen_flags: <defaults>
</compile_context>

<pallas_src>
import functools

import jax
import jax.numpy as jnp
from jax.experimental import pallas as pl
from jax.experimental.pallas import tpu as pltpu


def _ssd_loss_block_kernel(loc_ref, cls_p_ref, cls_t_ref, out_ref, vcol_ref,
                           *, neg_ind, batch_block, chunk):
    """B_blk batch samples per grid step.

    Ref shapes:
      loc_ref   : [B, 8, A_pad]  f32   (rows 0-3 loc_preds, rows 4-7 loc_targets)
      cls_p_ref : [B, C, A_pad]  f32
      cls_t_ref : [B, 1, A_pad]  i32   (padding anchors / samples labelled -1)
      out_ref   : [B, 2, 128]    f32   (row 0 loss-sum, row 1 num_pos, lane-bcast)
      vcol_ref  : [A_pad, 8]     f32   scratch (column-layout copy of v, reused)
    """
    a_pad = loc_ref.shape[-1]

    cls_t = cls_t_ref[...]                                    # [B,1,Ap] i32
    pos = cls_t > 0                                           # [B,1,Ap]
    posf = pos.astype(jnp.float32)
    num_pos = jnp.sum(posf, axis=2, keepdims=True)            # [B,1,1]

    # ---- localization loss (smooth-L1, beta=1, positives only) ----
    # torch loop: "if cls_targets[i, 0] == neg_ind: loc_preds[i] = loc_targets[i]"
    locs = loc_ref[...]                                       # [B,8,Ap]
    diff = locs[:, 0:4, :] - locs[:, 4:8, :]                  # [B,4,Ap]
    first_is_neg = cls_t[:, :, 0:1] == neg_ind                # [B,1,1]
    diff = jnp.where(first_is_neg, 0.0, diff)
    absd = jnp.abs(diff)
    sl1 = jnp.where(absd < 1.0, 0.5 * diff * diff, absd - 0.5)
    loc_per_anchor = jnp.sum(sl1, axis=1, keepdims=True) * posf       # [B,1,Ap]

    # ---- per-anchor cross entropy (anchors with label < 0 are zeroed) ----
    cls_p = cls_p_ref[...].astype(jnp.float32)                # [B,C,Ap]
    mx = jnp.max(cls_p, axis=1, keepdims=True)                # [B,1,Ap]
    lse = jnp.log(jnp.sum(jnp.exp(cls_p - mx), axis=1, keepdims=True)) + mx
    c_iota = jax.lax.broadcasted_iota(jnp.int32, cls_p.shape[1:], 0)  # [C,Ap]
    tgt = jnp.maximum(cls_t, 0)                               # [B,1,Ap]
    logit_t = jnp.sum(jnp.where(c_iota[None] == tgt, cls_p, 0.0),
                      axis=1, keepdims=True)                  # [B,1,Ap]
    ce = jnp.where(cls_t < 0, 0.0, lse - logit_t)             # [B,1,Ap]

    # ---- hard-negative mining: streaming stable-ascending rank of v ----
    # rank[j] = #{k : v[k] < v[j]} + #{k < j : v[k] == v[j]}
    v = ce * (posf - 1.0)                                     # [B,1,Ap], all <= 0

    # tie-break iotas for one [chunk, Ap] tile (built once per grid step)
    row_iota = jax.lax.broadcasted_iota(jnp.int32, (chunk, a_pad), 0)
    lane_iota = jax.lax.broadcasted_iota(jnp.int32, (chunk, a_pad), 1)
    n_chunks = a_pad // chunk

    for b in range(batch_block):
        v_b = v[b]                                            # [1,Ap]
        # Column-layout copy of v_b (one small 8xAp transpose, no full matrix).
        vcol_ref[...] = jnp.transpose(jnp.broadcast_to(v_b, (8, a_pad)), (1, 0))
        vj = jnp.broadcast_to(v_b, (chunk, a_pad))            # loop-invariant

        def chunk_body(s, rank_acc):
            base = pl.multiple_of(s * chunk, chunk)
            vals = vcol_ref[pl.ds(base, chunk), :]            # [chunk, 8]
            vk = jnp.broadcast_to(vals[:, 0:1], (chunk, a_pad))
            kidx = row_iota + base
            before = (vk < vj) | ((vk == vj) & (kidx < lane_iota))
            return rank_acc + jnp.sum(before.astype(jnp.float32),
                                      axis=0, keepdims=True)

        rank_b = jax.lax.fori_loop(0, n_chunks, chunk_body,
                                   jnp.zeros((1, a_pad), jnp.float32))

        num_pos_b = num_pos[b]                                # [1,1]
        neg_b = rank_b < 3.0 * num_pos_b                      # [1,Ap]
        sel = jnp.logical_or(pos[b], neg_b)
        cls_sel = jnp.where(sel, ce[b], 0.0)                  # [1,Ap]
        total_b = jnp.sum(loc_per_anchor[b] + cls_sel, axis=1, keepdims=True)

        out_ref[b, :, :] = jnp.concatenate(
            [jnp.broadcast_to(total_b, (1, 128)),
             jnp.broadcast_to(num_pos_b, (1, 128))], axis=0)


@functools.partial(jax.jit,
                   static_argnames=("num_classes", "neg_ind", "batch_block"))
def ssd_loss_neg(loc_preds, loc_targets, cls_preds, cls_targets, *,
                 num_classes, neg_ind, batch_block=4):
    n, a, _ = loc_preds.shape
    assert cls_preds.shape == (n, a, num_classes)
    a_pad = pl.cdiv(a, 128) * 128
    b_blk = max(1, min(batch_block, n))
    n_pad = pl.cdiv(n, b_blk) * b_blk
    pad_a = a_pad - a
    pad_n = n_pad - n

    # Lane-dense relayout: anchors -> last (lane) dim, padded to 128 multiple;
    # loc preds+targets packed into one 8-sublane stream; batch padded with
    # loss-neutral samples (label -1 everywhere => ce=0, pos=0, loc=0).
    # TODO(synk): produce this layout upstream to avoid this extra HBM pass.
    loc_p = jnp.transpose(loc_preds.astype(jnp.float32), (0, 2, 1))    # [N,4,A]
    loc_t = jnp.transpose(loc_targets.astype(jnp.float32), (0, 2, 1))  # [N,4,A]
    loc_pack = jnp.concatenate([loc_p, loc_t], axis=1)                 # [N,8,A]
    cls_p = jnp.transpose(cls_preds.astype(jnp.float32), (0, 2, 1))    # [N,C,A]
    cls_t = cls_targets.astype(jnp.int32)[:, None, :]                  # [N,1,A]

    loc_pack = jnp.pad(loc_pack, ((0, pad_n), (0, 0), (0, pad_a)))
    cls_p = jnp.pad(cls_p, ((0, pad_n), (0, 0), (0, pad_a)))
    cls_t = jnp.pad(cls_t, ((0, pad_n), (0, 0), (0, pad_a)),
                    constant_values=-1)

    c = num_classes
    kernel = functools.partial(_ssd_loss_block_kernel, neg_ind=neg_ind,
                               batch_block=b_blk, chunk=8)
    out = pl.pallas_call(
        kernel,
        out_shape=jax.ShapeDtypeStruct((n_pad, 2, 128), jnp.float32),
        grid=(n_pad // b_blk,),
        in_specs=[
            pl.BlockSpec((b_blk, 8, a_pad), lambda i: (i, 0, 0)),
            pl.BlockSpec((b_blk, c, a_pad), lambda i: (i, 0, 0)),
            pl.BlockSpec((b_blk, 1, a_pad), lambda i: (i, 0, 0)),
        ],
        out_specs=pl.BlockSpec((b_blk, 2, 128), lambda i: (i, 0, 0)),
        scratch_shapes=[pltpu.VMEM((a_pad, 8), jnp.float32)],
        compiler_params=pltpu.CompilerParams(
            dimension_semantics=("parallel",),
            vmem_limit_bytes=32 * 1024 * 1024),
    )(loc_pack, cls_p, cls_t)

    total = jnp.sum(out[:, 0, 0])          # padded samples contribute 0
    num_pos = jnp.sum(out[:, 1, 0])
    # (loc+cls)/num_pos if num_pos > 0 else (loc+cls)  ==  (loc+cls)/max(num_pos,1)
    return total / jnp.maximum(num_pos, 1.0)


def _reference(loc_preds, loc_targets, cls_preds, cls_targets, num_classes, neg_ind):
    """Pure-JAX re-implementation of the PyTorch forward (for validation)."""
    pos = cls_targets > 0
    first_is_neg = cls_targets[:, 0] == neg_ind
    loc_preds = jnp.where(first_is_neg[:, None, None], loc_targets, loc_preds)
    diff = loc_preds - loc_targets
    absd = jnp.abs(diff)
    sl1 = jnp.where(absd < 1.0, 0.5 * diff * diff, absd - 0.5)
    loc_loss = jnp.sum(sl1 * pos[:, :, None].astype(jnp.float32))
    logp = jax.nn.log_softmax(cls_preds, axis=-1)
    tgt = jnp.maximum(cls_targets, 0)
    ce = -jnp.take_along_axis(logp, tgt[:, :, None], axis=-1)[:, :, 0]
    ce = jnp.where(cls_targets < 0, 0.0, ce)
    v = ce * (pos.astype(jnp.float32) - 1.0)
    idx = jnp.argsort(v, axis=1)          # stable ascending, like the rank trick
    rank = jnp.argsort(idx, axis=1)
    num_neg = 3 * jnp.sum(pos.astype(jnp.int32), axis=1)
    neg = rank < num_neg[:, None]
    cls_loss = jnp.sum(ce * (pos | neg).astype(jnp.float32))
    num_pos = jnp.sum(pos.astype(jnp.float32))
    return jnp.where(num_pos > 0.0,
                     (loc_loss + cls_loss) / jnp.maximum(num_pos, 1.0),
                     loc_loss + cls_loss)


if __name__ == "__main__":
    N, A, C = 6, 64, 16       # batch, anchors, num_classes (small demo sizes)
    NEG_IND = 0               # background / "negative" label index

    key = jax.random.PRNGKey(0)
    k1, k2, k3, k4 = jax.random.split(key, 4)
    loc_preds = jax.random.normal(k1, (N, A, 4), jnp.float32)
    loc_targets = jax.random.normal(k2, (N, A, 4), jnp.float32)
    cls_preds = jax.random.normal(k3, (N, A, C), jnp.float32)
    # labels in [-1, C): -1 = ignored, 0 = background, >0 = positive
    cls_targets = jax.random.randint(k4, (N, A), -1, C).astype(jnp.int32)
    # exercise the "first anchor of sample is neg_ind" branch for sample 1
    cls_targets = cls_targets.at[1, 0].set(NEG_IND)

    loss = ssd_loss_neg(loc_preds, loc_targets, cls_preds, cls_targets,
                        num_classes=C, neg_ind=NEG_IND, batch_block=4)
    jax.block_until_ready(loss)

    ref = _reference(loc_preds, loc_targets, cls_preds, cls_targets, C, NEG_IND)
    assert abs(float(loss) - float(ref)) <= 1e-3 * max(1.0, abs(float(ref))), (
        f"kernel {float(loss)} vs ref {float(ref)}")
    print("KERNEL_OK")
</pallas_src>

<mosaic_0001>
module attributes {stable_mosaic.version = 11 : i64} {
  func.func @_ssd_loss_block_kernel(%arg0: i32, %arg1: memref<4x8x128xf32, #tpu.memory_space<vmem>>, %arg2: memref<4x16x128xf32, #tpu.memory_space<vmem>>, %arg3: memref<4x1x128xi32, #tpu.memory_space<vmem>>, %arg4: memref<4x2x128xf32, #tpu.memory_space<vmem>>, %arg5: memref<128x8xf32, #tpu.memory_space<vmem>>) attributes {dimension_semantics = [#tpu.dimension_semantics<parallel>], iteration_bounds = array<i64: 2>, scalar_prefetch = 0 : i64, scratch_operands = 1 : i64, tpu.core_type = #tpu.core_type<tc>, window_params = [{transform_indices = @transform_0, window_bounds = array<i64: 4, 8, 128>}, {transform_indices = @transform_1, window_bounds = array<i64: 4, 16, 128>}, {transform_indices = @transform_2, window_bounds = array<i64: 4, 1, 128>}, {transform_indices = @transform_3, window_bounds = array<i64: 4, 2, 128>}]} {
    %c0 = arith.constant 0 : index
    %c0_0 = arith.constant 0 : index
    %c0_1 = arith.constant 0 : index
    %0 = vector.load %arg3[%c0, %c0_0, %c0_1] : memref<4x1x128xi32, #tpu.memory_space<vmem>>, vector<4x1x128xi32>
    %c0_i32 = arith.constant 0 : i32
    %1 = vector.broadcast %c0_i32 : i32 to vector<4x1x128xi32>
    %2 = arith.cmpi sgt, %0, %1 : vector<4x1x128xi32>
    %3 = arith.extui %2 : vector<4x1x128xi1> to vector<4x1x128xi32>
    %4 = arith.sitofp %3 : vector<4x1x128xi32> to vector<4x1x128xf32>
    %cst = arith.constant dense<0.000000e+00> : vector<4x1xf32>
    %5 = vector.multi_reduction <add>, %4, %cst [2] : vector<4x1x128xf32> to vector<4x1xf32>
    %6 = vector.shape_cast %5 : vector<4x1xf32> to vector<4x1x1xf32>
    %c0_2 = arith.constant 0 : index
    %c0_3 = arith.constant 0 : index
    %c0_4 = arith.constant 0 : index
    %7 = vector.load %arg1[%c0_2, %c0_3, %c0_4] : memref<4x8x128xf32, #tpu.memory_space<vmem>>, vector<4x8x128xf32>
    %8 = vector.extract_strided_slice %7 {offsets = [0, 0, 0], sizes = [4, 4, 128], strides = [1, 1, 1]} : vector<4x8x128xf32> to vector<4x4x128xf32>
    %9 = vector.extract_strided_slice %7 {offsets = [0, 4, 0], sizes = [4, 4, 128], strides = [1, 1, 1]} : vector<4x8x128xf32> to vector<4x4x128xf32>
    %10 = arith.subf %8, %9 : vector<4x4x128xf32>
    %11 = vector.extract_strided_slice %0 {offsets = [0, 0, 0], sizes = [4, 1, 1], strides = [1, 1, 1]} : vector<4x1x128xi32> to vector<4x1x1xi32>
    %c0_i32_5 = arith.constant 0 : i32
    %12 = vector.broadcast %c0_i32_5 : i32 to vector<4x1x1xi32>
    %13 = arith.cmpi eq, %11, %12 : vector<4x1x1xi32>
    %cst_6 = arith.constant 0.000000e+00 : f32
    %14 = vector.shape_cast %13 : vector<4x1x1xi1> to vector<4x1x1xi1>
    %15 = vector.broadcast %14 : vector<4x1x1xi1> to vector<4x4x128xi1>
    %16 = vector.broadcast %cst_6 : f32 to vector<4x4x128xf32>
    %17 = arith.select %15, %16, %10 : vector<4x4x128xi1>, vector<4x4x128xf32>
    %18 = math.absf %17 : vector<4x4x128xf32>
    %cst_7 = arith.constant 1.000000e+00 : f32
    %19 = vector.broadcast %cst_7 : f32 to vector<4x4x128xf32>
    %20 = arith.cmpf olt, %18, %19 : vector<4x4x128xf32>
    %cst_8 = arith.constant 5.000000e-01 : f32
    %21 = vector.broadcast %cst_8 : f32 to vector<4x4x128xf32>
    %22 = arith.mulf %21, %17 : vector<4x4x128xf32>
    %23 = arith.mulf %22, %17 : vector<4x4x128xf32>
    %cst_9 = arith.constant 5.000000e-01 : f32
    %24 = vector.broadcast %cst_9 : f32 to vector<4x4x128xf32>
    %25 = arith.subf %18, %24 : vector<4x4x128xf32>
    %26 = arith.select %20, %23, %25 : vector<4x4x128xi1>, vector<4x4x128xf32>
    %cst_10 = arith.constant dense<0.000000e+00> : vector<4x128xf32>
    %27 = vector.multi_reduction <add>, %26, %cst_10 [1] : vector<4x4x128xf32> to vector<4x128xf32>
    %28 = vector.shape_cast %27 : vector<4x128xf32> to vector<4x1x128xf32>
    %29 = arith.mulf %28, %4 : vector<4x1x128xf32>
    %c0_11 = arith.constant 0 : index
    %c0_12 = arith.constant 0 : index
    %c0_13 = arith.constant 0 : index
    %30 = vector.load %arg2[%c0_11, %c0_12, %c0_13] : memref<4x16x128xf32, #tpu.memory_space<vmem>>, vector<4x16x128xf32>
    %cst_14 = arith.constant dense<0xFF800000> : vector<4x128xf32>
    %31 = vector.multi_reduction <maximumf>, %30, %cst_14 [1] : vector<4x16x128xf32> to vector<4x128xf32>
    %32 = vector.shape_cast %31 : vector<4x128xf32> to vector<4x1x128xf32>
    %33 = vector.broadcast %32 : vector<4x1x128xf32> to vector<4x16x128xf32>
    %34 = arith.subf %30, %33 : vector<4x16x128xf32>
    %35 = math.exp %34 : vector<4x16x128xf32>
    %cst_15 = arith.constant dense<0.000000e+00> : vector<4x128xf32>
    %36 = vector.multi_reduction <add>, %35, %cst_15 [1] : vector<4x16x128xf32> to vector<4x128xf32>
    %37 = vector.shape_cast %36 : vector<4x128xf32> to vector<4x1x128xf32>
    %38 = math.log %37 : vector<4x1x128xf32>
    %39 = arith.addf %38, %32 : vector<4x1x128xf32>
    %40 = tpu.iota {dimensions = array<i32: 0>} : vector<16x128xi32>
    %c0_i32_16 = arith.constant 0 : i32
    %41 = vector.broadcast %c0_i32_16 : i32 to vector<4x1x128xi32>
    %42 = arith.maxsi %0, %41 : vector<4x1x128xi32>
    %43 = vector.shape_cast %40 : vector<16x128xi32> to vector<1x16x128xi32>
    %44 = vector.broadcast %43 : vector<1x16x128xi32> to vector<4x16x128xi32>
    %45 = vector.broadcast %42 : vector<4x1x128xi32> to vector<4x16x128xi32>
    %46 = arith.cmpi eq, %44, %45 : vector<4x16x128xi32>
    %cst_17 = arith.constant 0.000000e+00 : f32
    %47 = vector.broadcast %cst_17 : f32 to vector<4x16x128xf32>
    %48 = arith.select %46, %30, %47 : vector<4x16x128xi1>, vector<4x16x128xf32>
    %cst_18 = arith.constant dense<0.000000e+00> : vector<4x128xf32>
    %49 = vector.multi_reduction <add>, %48, %cst_18 [1] : vector<4x16x128xf32> to vector<4x128xf32>
    %50 = vector.shape_cast %49 : vector<4x128xf32> to vector<4x1x128xf32>
    %c0_i32_19 = arith.constant 0 : i32
    %51 = vector.broadcast %c0_i32_19 : i32 to vector<4x1x128xi32>
    %52 = arith.cmpi slt, %0, %51 : vector<4x1x128xi32>
    %53 = arith.subf %39, %50 : vector<4x1x128xf32>
    %cst_20 = arith.constant 0.000000e+00 : f32
    %54 = vector.broadcast %cst_20 : f32 to vector<4x1x128xf32>
    %55 = arith.select %52, %54, %53 : vector<4x1x128xi1>, vector<4x1x128xf32>
    %cst_21 = arith.constant 1.000000e+00 : f32
    %56 = vector.broadcast %cst_21 : f32 to vector<4x1x128xf32>
    %57 = arith.subf %4, %56 : vector<4x1x128xf32>
    %58 = arith.mulf %55, %57 : vector<4x1x128xf32>
    %59 = tpu.iota {dimensions = array<i32: 0>} : vector<8x128xi32>
    %60 = tpu.iota {dimensions = array<i32: 1>} : vector<8x128xi32>
    %61 = vector.extract_strided_slice %58 {offsets = [0, 0, 0], sizes = [1, 1, 128], strides = [1, 1, 1]} : vector<4x1x128xf32> to vector<1x1x128xf32>
    %62 = vector.shape_cast %61 : vector<1x1x128xf32> to vector<1x128xf32>
    %63 = vector.shape_cast %62 : vector<1x128xf32> to vector<1x128xf32>
    %64 = vector.broadcast %63 : vector<1x128xf32> to vector<8x128xf32>
    %65 = tpu.transpose %64, [1, 0] : vector<8x128xf32> -> vector<128x8xf32>
    %c0_22 = arith.constant 0 : index
    %c0_23 = arith.constant 0 : index
    %66 = vector.load %arg5[%c0_22, %c0_23] : memref<128x8xf32, #tpu.memory_space<vmem>>, vector<128x8xf32>
    tpu.vector_store %arg5[%c0_22, %c0_23], %65 {strides = array<i32>} : memref<128x8xf32, #tpu.memory_space<vmem>>, vector<128x8xf32>,
    %67 = vector.shape_cast %62 : vector<1x128xf32> to vector<1x128xf32>
    %68 = vector.broadcast %67 : vector<1x128xf32> to vector<8x128xf32>
    %cst_24 = arith.constant 0.000000e+00 : f32
    %69 = vector.broadcast %cst_24 : f32 to vector<1x128xf32>
    %c0_i32_25 = arith.constant 0 : i32
    %c16_i32 = arith.constant 16 : i32
    %70 = arith.addi %c0_i32_25, %c16_i32 : i32
    %c1_i32 = arith.constant 1 : i32
    %71 = scf.for %arg6 = %c0_i32_25 to %70 step %c1_i32 iter_args(%arg7 = %69) -> (vector<1x128xf32>)  : i32 {
      %c8_i32 = arith.constant 8 : i32
      %209 = arith.muli %arg6, %c8_i32 : i32
      %210 = tpu.assume_multiple %209, 8 : i32
      %211 = arith.index_cast %210 : i32 to index
      %c0_69 = arith.constant 0 : index
      %212 = vector.load %arg5[%211, %c0_69] : memref<128x8xf32, #tpu.memory_space<vmem>>, vector<8x8xf32>
      %213 = vector.extract_strided_slice %212 {offsets = [0, 0], sizes = [8, 1], strides = [1, 1]} : vector<8x8xf32> to vector<8x1xf32>
      %214 = vector.shape_cast %213 : vector<8x1xf32> to vector<8x1xf32>
      %215 = vector.broadcast %214 : vector<8x1xf32> to vector<8x128xf32>
      %216 = vector.broadcast %210 : i32 to vector<8x128xi32>
      %217 = arith.addi %59, %216 : vector<8x128xi32>
      %218 = arith.cmpf olt, %215, %68 : vector<8x128xf32>
      %219 = arith.cmpf oeq, %215, %68 : vector<8x128xf32>
      %220 = arith.cmpi slt, %217, %60 : vector<8x128xi32>
      %221 = arith.andi %219, %220 : vector<8x128xi1>
      %222 = arith.ori %218, %221 : vector<8x128xi1>
      %223 = arith.extui %222 : vector<8x128xi1> to vector<8x128xi32>
      %224 = arith.sitofp %223 : vector<8x128xi32> to vector<8x128xf32>
      %cst_70 = arith.constant dense<0.000000e+00> : vector<128xf32>
      %225 = vector.multi_reduction <add>, %224, %cst_70 [0] : vector<8x128xf32> to vector<128xf32>
      %226 = vector.shape_cast %225 : vector<128xf32> to vector<1x128xf32>
      %227 = arith.addf %arg7, %226 : vector<1x128xf32>
      scf.yield %227 : vector<1x128xf32>
    }
    %c16_i32_26 = arith.constant 16 : i32
    %72 = vector.extract_strided_slice %6 {offsets = [0, 0, 0], sizes = [1, 1, 1], strides = [1, 1, 1]} : vector<4x1x1xf32> to vector<1x1x1xf32>
    %73 = vector.shape_cast %72 : vector<1x1x1xf32> to vector<1x1xf32>
    %cst_27 = arith.constant 3.000000e+00 : f32
    %74 = vector.broadcast %cst_27 : f32 to vector<1x1xf32>
    %75 = arith.mulf %74, %73 : vector<1x1xf32>
    %76 = vector.broadcast %75 : vector<1x1xf32> to vector<1x128xf32>
    %77 = arith.cmpf olt, %71, %76 : vector<1x128xf32>
    %78 = vector.extract_strided_slice %2 {offsets = [0, 0, 0], sizes = [1, 1, 128], strides = [1, 1, 1]} : vector<4x1x128xi1> to vector<1x1x128xi1>
    %79 = vector.shape_cast %78 : vector<1x1x128xi1> to vector<1x128xi1>
    %80 = arith.ori %79, %77 : vector<1x128xi1>
    %81 = vector.extract_strided_slice %55 {offsets = [0, 0, 0], sizes = [1, 1, 128], strides = [1, 1, 1]} : vector<4x1x128xf32> to vector<1x1x128xf32>
    %82 = vector.shape_cast %81 : vector<1x1x128xf32> to vector<1x128xf32>
    %cst_28 = arith.constant 0.000000e+00 : f32
    %83 = vector.broadcast %cst_28 : f32 to vector<1x128xf32>
    %84 = arith.select %80, %82, %83 : vector<1x128xi1>, vector<1x128xf32>
    %85 = vector.extract_strided_slice %29 {offsets = [0, 0, 0], sizes = [1, 1, 128], strides = [1, 1, 1]} : vector<4x1x128xf32> to vector<1x1x128xf32>
    %86 = vector.shape_cast %85 : vector<1x1x128xf32> to vector<1x128xf32>
    %87 = arith.addf %86, %84 : vector<1x128xf32>
    %cst_29 = arith.constant dense<0.000000e+00> : vector<1xf32>
    %88 = vector.multi_reduction <add>, %87, %cst_29 [1] : vector<1x128xf32> to vector<1xf32>
    %89 = vector.shape_cast %88 : vector<1xf32> to vector<1x1xf32>
    %90 = vector.shape_cast %89 : vector<1x1xf32> to vector<1x1xf32>
    %91 = vector.broadcast %90 : vector<1x1xf32> to vector<1x128xf32>
    %92 = vector.shape_cast %73 : vector<1x1xf32> to vector<1x1xf32>
    %93 = vector.broadcast %92 : vector<1x1xf32> to vector<1x128xf32>
    %94 = tpu.concatenate %91, %93 in 0 : vector<1x128xf32>, vector<1x128xf32> -> vector<2x128xf32>
    %c0_30 = arith.constant 0 : index
    %c0_31 = arith.constant 0 : index
    %c0_32 = arith.constant 0 : index
    %95 = vector.load %arg4[%c0_30, %c0_31, %c0_32] : memref<4x2x128xf32, #tpu.memory_space<vmem>>, vector<1x2x128xf32>
    %96 = vector.shape_cast %95 : vector<1x2x128xf32> to vector<2x128xf32>
    %97 = vector.shape_cast %94 : vector<2x128xf32> to vector<1x2x128xf32>
    tpu.vector_store %arg4[%c0_30, %c0_31, %c0_32], %97 {strides = array<i32>} : memref<4x2x128xf32, #tpu.memory_space<vmem>>, vector<1x2x128xf32>,
    %98 = vector.extract_strided_slice %58 {offsets = [1, 0, 0], sizes = [1, 1, 128], strides = [1, 1, 1]} : vector<4x1x128xf32> to vector<1x1x128xf32>
    %99 = vector.shape_cast %98 : vector<1x1x128xf32> to vector<1x128xf32>
    %100 = vector.shape_cast %99 : vector<1x128xf32> to vector<1x128xf32>
    %101 = vector.broadcast %100 : vector<1x128xf32> to vector<8x128xf32>
    %102 = tpu.transpose %101, [1, 0] : vector<8x128xf32> -> vector<128x8xf32>
    %c0_33 = arith.constant 0 : index
    %c0_34 = arith.constant 0 : index
    %103 = vector.load %arg5[%c0_33, %c0_34] : memref<128x8xf32, #tpu.memory_space<vmem>>, vector<128x8xf32>
    tpu.vector_store %arg5[%c0_33, %c0_34], %102 {strides = array<i32>} : memref<128x8xf32, #tpu.memory_space<vmem>>, vector<128x8xf32>,
    %104 = vector.shape_cast %99 : vector<1x128xf32> to vector<1x128xf32>
    %105 = vector.broadcast %104 : vector<1x128xf32> to vector<8x128xf32>
    %cst_35 = arith.constant 0.000000e+00 : f32
    %106 = vector.broadcast %cst_35 : f32 to vector<1x128xf32>
    %c0_i32_36 = arith.constant 0 : i32
    %c16_i32_37 = arith.constant 16 : i32
    %107 = arith.addi %c0_i32_36, %c16_i32_37 : i32
    %c1_i32_38 = arith.constant 1 : i32
    %108 = scf.for %arg6 = %c0_i32_36 to %107 step %c1_i32_38 iter_args(%arg7 = %106) -> (vector<1x128xf32>)  : i32 {
      %c8_i32 = arith.constant 8 : i32
      %209 = arith.muli %arg6, %c8_i32 : i32
      %210 = tpu.assume_multiple %209, 8 : i32
      %211 = arith.index_cast %210 : i32 to index
      %c0_69 = arith.constant 0 : index
      %212 = vector.load %arg5[%211, %c0_69] : memref<128x8xf32, #tpu.memory_space<vmem>>, vector<8x8xf32>
      %213 = vector.extract_strided_slice %212 {offsets = [0, 0], sizes = [8, 1], strides = [1, 1]} : vector<8x8xf32> to vector<8x1xf32>
      %214 = vector.shape_cast %213 : vector<8x1xf32> to vector<8x1xf32>
      %215 = vector.broadcast %214 : vector<8x1xf32> to vector<8x128xf32>
      %216 = vector.broadcast %210 : i32 to vector<8x128xi32>
      %217 = arith.addi %59, %216 : vector<8x128xi32>
      %218 = arith.cmpf olt, %215, %105 : vector<8x128xf32>
      %219 = arith.cmpf oeq, %215, %105 : vector<8x128xf32>
      %220 = arith.cmpi slt, %217, %60 : vector<8x128xi32>
      %221 = arith.andi %219, %220 : vector<8x128xi1>
      %222 = arith.ori %218, %221 : vector<8x128xi1>
      %223 = arith.extui %222 : vector<8x128xi1> to vector<8x128xi32>
      %224 = arith.sitofp %223 : vector<8x128xi32> to vector<8x128xf32>
      %cst_70 = arith.constant dense<0.000000e+00> : vector<128xf32>
      %225 = vector.multi_reduction <add>, %224, %cst_70 [0] : vector<8x128xf32> to vector<128xf32>
      %226 = vector.shape_cast %225 : vector<128xf32> to vector<1x128xf32>
      %227 = arith.addf %arg7, %226 : vector<1x128xf32>
      scf.yield %227 : vector<1x128xf32>
    }
    %c16_i32_39 = arith.constant 16 : i32
    %109 = vector.extract_strided_slice %6 {offsets = [1, 0, 0], sizes = [1, 1, 1], strides = [1, 1, 1]} : vector<4x1x1xf32> to vector<1x1x1xf32>
    %110 = vector.shape_cast %109 : vector<1x1x1xf32> to vector<1x1xf32>
    %cst_40 = arith.constant 3.000000e+00 : f32
    %111 = vector.broadcast %cst_40 : f32 to vector<1x1xf32>
    %112 = arith.mulf %111, %110 : vector<1x1xf32>
    %113 = vector.broadcast %112 : vector<1x1xf32> to vector<1x128xf32>
    %114 = arith.cmpf olt, %108, %113 : vector<1x128xf32>
    %115 = vector.extract_strided_slice %2 {offsets = [1, 0, 0], sizes = [1, 1, 128], strides = [1, 1, 1]} : vector<4x1x128xi1> to vector<1x1x128xi1>
    %116 = vector.shape_cast %115 : vector<1x1x128xi1> to vector<1x128xi1>
    %117 = arith.ori %116, %114 : vector<1x128xi1>
    %118 = vector.extract_strided_slice %55 {offsets = [1, 0, 0], sizes = [1, 1, 128], strides = [1, 1, 1]} : vector<4x1x128xf32> to vector<1x1x128xf32>
    %119 = vector.shape_cast %118 : vector<1x1x128xf32> to vector<1x128xf32>
    %cst_41 = arith.constant 0.000000e+00 : f32
    %120 = vector.broadcast %cst_41 : f32 to vector<1x128xf32>
    %121 = arith.select %117, %119, %120 : vector<1x128xi1>, vector<1x128xf32>
    %122 = vector.extract_strided_slice %29 {offsets = [1, 0, 0], sizes = [1, 1, 128], strides = [1, 1, 1]} : vector<4x1x128xf32> to vector<1x1x128xf32>
    %123 = vector.shape_cast %122 : vector<1x1x128xf32> to vector<1x128xf32>
    %124 = arith.addf %123, %121 : vector<1x128xf32>
    %cst_42 = arith.constant dense<0.000000e+00> : vector<1xf32>
    %125 = vector.multi_reduction <add>, %124, %cst_42 [1] : vector<1x128xf32> to vector<1xf32>
    %126 = vector.shape_cast %125 : vector<1xf32> to vector<1x1xf32>
    %127 = vector.shape_cast %126 : vector<1x1xf32> to vector<1x1xf32>
    %128 = vector.broadcast %127 : vector<1x1xf32> to vector<1x128xf32>
    %129 = vector.shape_cast %110 : vector<1x1xf32> to vector<1x1xf32>
    %130 = vector.broadcast %129 : vector<1x1xf32> to vector<1x128xf32>
    %131 = tpu.concatenate %128, %130 in 0 : vector<1x128xf32>, vector<1x128xf32> -> vector<2x128xf32>
    %c1 = arith.constant 1 : index
    %c0_43 = arith.constant 0 : index
    %c0_44 = arith.constant 0 : index
    %132 = vector.load %arg4[%c1, %c0_43, %c0_44] : memref<4x2x128xf32, #tpu.memory_space<vmem>>, vector<1x2x128xf32>
    %133 = vector.shape_cast %132 : vector<1x2x128xf32> to vector<2x128xf32>
    %134 = vector.shape_cast %131 : vector<2x128xf32> to vector<1x2x128xf32>
    tpu.vector_store %arg4[%c1, %c0_43, %c0_44], %134 {strides = array<i32>} : memref<4x2x128xf32, #tpu.memory_space<vmem>>, vector<1x2x128xf32>,
    %135 = vector.extract_strided_slice %58 {offsets = [2, 0, 0], sizes = [1, 1, 128], strides = [1, 1, 1]} : vector<4x1x128xf32> to vector<1x1x128xf32>
    %136 = vector.shape_cast %135 : vector<1x1x128xf32> to vector<1x128xf32>
    %137 = vector.shape_cast %136 : vector<1x128xf32> to vector<1x128xf32>
    %138 = vector.broadcast %137 : vector<1x128xf32> to vector<8x128xf32>
    %139 = tpu.transpose %138, [1, 0] : vector<8x128xf32> -> vector<128x8xf32>
    %c0_45 = arith.constant 0 : index
    %c0_46 = arith.constant 0 : index
    %140 = vector.load %arg5[%c0_45, %c0_46] : memref<128x8xf32, #tpu.memory_space<vmem>>, vector<128x8xf32>
    tpu.vector_store %arg5[%c0_45, %c0_46], %139 {strides = array<i32>} : memref<128x8xf32, #tpu.memory_space<vmem>>, vector<128x8xf32>,
    %141 = vector.shape_cast %136 : vector<1x128xf32> to vector<1x128xf32>
    %142 = vector.broadcast %141 : vector<1x128xf32> to vector<8x128xf32>
    %cst_47 = arith.constant 0.000000e+00 : f32
    %143 = vector.broadcast %cst_47 : f32 to vector<1x128xf32>
    %c0_i32_48 = arith.constant 0 : i32
    %c16_i32_49 = arith.constant 16 : i32
    %144 = arith.addi %c0_i32_48, %c16_i32_49 : i32
    %c1_i32_50 = arith.constant 1 : i32
    %145 = scf.for %arg6 = %c0_i32_48 to %144 step %c1_i32_50 iter_args(%arg7 = %143) -> (vector<1x128xf32>)  : i32 {
      %c8_i32 = arith.constant 8 : i32
      %209 = arith.muli %arg6, %c8_i32 : i32
      %210 = tpu.assume_multiple %209, 8 : i32
      %211 = arith.index_cast %210 : i32 to index
      %c0_69 = arith.constant 0 : index
      %212 = vector.load %arg5[%211, %c0_69] : memref<128x8xf32, #tpu.memory_space<vmem>>, vector<8x8xf32>
      %213 = vector.extract_strided_slice %212 {offsets = [0, 0], sizes = [8, 1], strides = [1, 1]} : vector<8x8xf32> to vector<8x1xf32>
      %214 = vector.shape_cast %213 : vector<8x1xf32> to vector<8x1xf32>
      %215 = vector.broadcast %214 : vector<8x1xf32> to vector<8x128xf32>
      %216 = vector.broadcast %210 : i32 to vector<8x128xi32>
      %217 = arith.addi %59, %216 : vector<8x128xi32>
      %218 = arith.cmpf olt, %215, %142 : vector<8x128xf32>
      %219 = arith.cmpf oeq, %215, %142 : vector<8x128xf32>
      %220 = arith.cmpi slt, %217, %60 : vector<8x128xi32>
      %221 = arith.andi %219, %220 : vector<8x128xi1>
      %222 = arith.ori %218, %221 : vector<8x128xi1>
      %223 = arith.extui %222 : vector<8x128xi1> to vector<8x128xi32>
      %224 = arith.sitofp %223 : vector<8x128xi32> to vector<8x128xf32>
      %cst_70 = arith.constant dense<0.000000e+00> : vector<128xf32>
      %225 = vector.multi_reduction <add>, %224, %cst_70 [0] : vector<8x128xf32> to vector<128xf32>
      %226 = vector.shape_cast %225 : vector<128xf32> to vector<1x128xf32>
      %227 = arith.addf %arg7, %226 : vector<1x128xf32>
      scf.yield %227 : vector<1x128xf32>
    }
    %c16_i32_51 = arith.constant 16 : i32
    %146 = vector.extract_strided_slice %6 {offsets = [2, 0, 0], sizes = [1, 1, 1], strides = [1, 1, 1]} : vector<4x1x1xf32> to vector<1x1x1xf32>
    %147 = vector.shape_cast %146 : vector<1x1x1xf32> to vector<1x1xf32>
    %cst_52 = arith.constant 3.000000e+00 : f32
    %148 = vector.broadcast %cst_52 : f32 to vector<1x1xf32>
    %149 = arith.mulf %148, %147 : vector<1x1xf32>
    %150 = vector.broadcast %149 : vector<1x1xf32> to vector<1x128xf32>
    %151 = arith.cmpf olt, %145, %150 : vector<1x128xf32>
    %152 = vector.extract_strided_slice %2 {offsets = [2, 0, 0], sizes = [1, 1, 128], strides = [1, 1, 1]} : vector<4x1x128xi1> to vector<1x1x128xi1>
    %153 = vector.shape_cast %152 : vector<1x1x128xi1> to vector<1x128xi1>
    %154 = arith.ori %153, %151 : vector<1x128xi1>
    %155 = vector.extract_strided_slice %55 {offsets = [2, 0, 0], sizes = [1, 1, 128], strides = [1, 1, 1]} : vector<4x1x128xf32> to vector<1x1x128xf32>
    %156 = vector.shape_cast %155 : vector<1x1x128xf32> to vector<1x128xf32>
    %cst_53 = arith.constant 0.000000e+00 : f32
    %157 = vector.broadcast %cst_53 : f32 to vector<1x128xf32>
    %158 = arith.select %154, %156, %157 : vector<1x128xi1>, vector<1x128xf32>
    %159 = vector.extract_strided_slice %29 {offsets = [2, 0, 0], sizes = [1, 1, 128], strides = [1, 1, 1]} : vector<4x1x128xf32> to vector<1x1x128xf32>
    %160 = vector.shape_cast %159 : vector<1x1x128xf32> to vector<1x128xf32>
    %161 = arith.addf %160, %158 : vector<1x128xf32>
    %cst_54 = arith.constant dense<0.000000e+00> : vector<1xf32>
    %162 = vector.multi_reduction <add>, %161, %cst_54 [1] : vector<1x128xf32> to vector<1xf32>
    %163 = vector.shape_cast %162 : vector<1xf32> to vector<1x1xf32>
    %164 = vector.shape_cast %163 : vector<1x1xf32> to vector<1x1xf32>
    %165 = vector.broadcast %164 : vector<1x1xf32> to vector<1x128xf32>
    %166 = vector.shape_cast %147 : vector<1x1xf32> to vector<1x1xf32>
    %167 = vector.broadcast %166 : vector<1x1xf32> to vector<1x128xf32>
    %168 = tpu.concatenate %165, %167 in 0 : vector<1x128xf32>, vector<1x128xf32> -> vector<2x128xf32>
    %c2 = arith.constant 2 : index
    %c0_55 = arith.constant 0 : index
    %c0_56 = arith.constant 0 : index
    %169 = vector.load %arg4[%c2, %c0_55, %c0_56] : memref<4x2x128xf32, #tpu.memory_space<vmem>>, vector<1x2x128xf32>
    %170 = vector.shape_cast %169 : vector<1x2x128xf32> to vector<2x128xf32>
    %171 = vector.shape_cast %168 : vector<2x128xf32> to vector<1x2x128xf32>
    tpu.vector_store %arg4[%c2, %c0_55, %c0_56], %171 {strides = array<i32>} : memref<4x2x128xf32, #tpu.memory_space<vmem>>, vector<1x2x128xf32>,
    %172 = vector.extract_strided_slice %58 {offsets = [3, 0, 0], sizes = [1, 1, 128], strides = [1, 1, 1]} : vector<4x1x128xf32> to vector<1x1x128xf32>
    %173 = vector.shape_cast %172 : vector<1x1x128xf32> to vector<1x128xf32>
    %174 = vector.shape_cast %173 : vector<1x128xf32> to vector<1x128xf32>
    %175 = vector.broadcast %174 : vector<1x128xf32> to vector<8x128xf32>
    %176 = tpu.transpose %175, [1, 0] : vector<8x128xf32> -> vector<128x8xf32>
    %c0_57 = arith.constant 0 : index
    %c0_58 = arith.constant 0 : index
    %177 = vector.load %arg5[%c0_57, %c0_58] : memref<128x8xf32, #tpu.memory_space<vmem>>, vector<128x8xf32>
    tpu.vector_store %arg5[%c0_57, %c0_58], %176 {strides = array<i32>} : memref<128x8xf32, #tpu.memory_space<vmem>>, vector<128x8xf32>,
    %178 = vector.shape_cast %173 : vector<1x128xf32> to vector<1x128xf32>
    %179 = vector.broadcast %178 : vector<1x128xf32> to vector<8x128xf32>
    %cst_59 = arith.constant 0.000000e+00 : f32
    %180 = vector.broadcast %cst_59 : f32 to vector<1x128xf32>
    %c0_i32_60 = arith.constant 0 : i32
    %c16_i32_61 = arith.constant 16 : i32
    %181 = arith.addi %c0_i32_60, %c16_i32_61 : i32
    %c1_i32_62 = arith.constant 1 : i32
    %182 = scf.for %arg6 = %c0_i32_60 to %181 step %c1_i32_62 iter_args(%arg7 = %180) -> (vector<1x128xf32>)  : i32 {
      %c8_i32 = arith.constant 8 : i32
      %209 = arith.muli %arg6, %c8_i32 : i32
      %210 = tpu.assume_multiple %209, 8 : i32
      %211 = arith.index_cast %210 : i32 to index
      %c0_69 = arith.constant 0 : index
      %212 = vector.load %arg5[%211, %c0_69] : memref<128x8xf32, #tpu.memory_space<vmem>>, vector<8x8xf32>
      %213 = vector.extract_strided_slice %212 {offsets = [0, 0], sizes = [8, 1], strides = [1, 1]} : vector<8x8xf32> to vector<8x1xf32>
      %214 = vector.shape_cast %213 : vector<8x1xf32> to vector<8x1xf32>
      %215 = vector.broadcast %214 : vector<8x1xf32> to vector<8x128xf32>
      %216 = vector.broadcast %210 : i32 to vector<8x128xi32>
      %217 = arith.addi %59, %216 : vector<8x128xi32>
      %218 = arith.cmpf olt, %215, %179 : vector<8x128xf32>
      %219 = arith.cmpf oeq, %215, %179 : vector<8x128xf32>
      %220 = arith.cmpi slt, %217, %60 : vector<8x128xi32>
      %221 = arith.andi %219, %220 : vector<8x128xi1>
      %222 = arith.ori %218, %221 : vector<8x128xi1>
      %223 = arith.extui %222 : vector<8x128xi1> to vector<8x128xi32>
      %224 = arith.sitofp %223 : vector<8x128xi32> to vector<8x128xf32>
      %cst_70 = arith.constant dense<0.000000e+00> : vector<128xf32>
      %225 = vector.multi_reduction <add>, %224, %cst_70 [0] : vector<8x128xf32> to vector<128xf32>
      %226 = vector.shape_cast %225 : vector<128xf32> to vector<1x128xf32>
      %227 = arith.addf %arg7, %226 : vector<1x128xf32>
      scf.yield %227 : vector<1x128xf32>
    }
    %c16_i32_63 = arith.constant 16 : i32
    %183 = vector.extract_strided_slice %6 {offsets = [3, 0, 0], sizes = [1, 1, 1], strides = [1, 1, 1]} : vector<4x1x1xf32> to vector<1x1x1xf32>
    %184 = vector.shape_cast %183 : vector<1x1x1xf32> to vector<1x1xf32>
    %cst_64 = arith.constant 3.000000e+00 : f32
    %185 = vector.broadcast %cst_64 : f32 to vector<1x1xf32>
    %186 = arith.mulf %185, %184 : vector<1x1xf32>
    %187 = vector.broadcast %186 : vector<1x1xf32> to vector<1x128xf32>
    %188 = arith.cmpf olt, %182, %187 : vector<1x128xf32>
    %189 = vector.extract_strided_slice %2 {offsets = [3, 0, 0], sizes = [1, 1, 128], strides = [1, 1, 1]} : vector<4x1x128xi1> to vector<1x1x128xi1>
    %190 = vector.shape_cast %189 : vector<1x1x128xi1> to vector<1x128xi1>
    %191 = arith.ori %190, %188 : vector<1x128xi1>
    %192 = vector.extract_strided_slice %55 {offsets = [3, 0, 0], sizes = [1, 1, 128], strides = [1, 1, 1]} : vector<4x1x128xf32> to vector<1x1x128xf32>
    %193 = vector.shape_cast %192 : vector<1x1x128xf32> to vector<1x128xf32>
    %cst_65 = arith.constant 0.000000e+00 : f32
    %194 = vector.broadcast %cst_65 : f32 to vector<1x128xf32>
    %195 = arith.select %191, %193, %194 : vector<1x128xi1>, vector<1x128xf32>
    %196 = vector.extract_strided_slice %29 {offsets = [3, 0, 0], sizes = [1, 1, 128], strides = [1, 1, 1]} : vector<4x1x128xf32> to vector<1x1x128xf32>
    %197 = vector.shape_cast %196 : vector<1x1x128xf32> to vector<1x128xf32>
    %198 = arith.addf %197, %195 : vector<1x128xf32>
    %cst_66 = arith.constant dense<0.000000e+00> : vector<1xf32>
    %199 = vector.multi_reduction <add>, %198, %cst_66 [1] : vector<1x128xf32> to vector<1xf32>
    %200 = vector.shape_cast %199 : vector<1xf32> to vector<1x1xf32>
    %201 = vector.shape_cast %200 : vector<1x1xf32> to vector<1x1xf32>
    %202 = vector.broadcast %201 : vector<1x1xf32> to vector<1x128xf32>
    %203 = vector.shape_cast %184 : vector<1x1xf32> to vector<1x1xf32>
    %204 = vector.broadcast %203 : vector<1x1xf32> to vector<1x128xf32>
    %205 = tpu.concatenate %202, %204 in 0 : vector<1x128xf32>, vector<1x128xf32> -> vector<2x128xf32>
    %c3 = arith.constant 3 : index
    %c0_67 = arith.constant 0 : index
    %c0_68 = arith.constant 0 : index
    %206 = vector.load %arg4[%c3, %c0_67, %c0_68] : memref<4x2x128xf32, #tpu.memory_space<vmem>>, vector<1x2x128xf32>
    %207 = vector.shape_cast %206 : vector<1x2x128xf32> to vector<2x128xf32>
    %208 = vector.shape_cast %205 : vector<2x128xf32> to vector<1x2x128xf32>
    tpu.vector_store %arg4[%c3, %c0_67, %c0_68], %208 {strides = array<i32>} : memref<4x2x128xf32, #tpu.memory_space<vmem>>, vector<1x2x128xf32>,
    return
  }
  func.func @transform_0(%arg0: i32) -> (i32, i32, i32) {
    %c0_i32 = arith.constant 0 : i32
    %c0_i32_0 = arith.constant 0 : i32
    %c0_i32_1 = arith.constant 0 : i32
    return %arg0, %c0_i32, %c0_i32_0 : i32, i32, i32
  }
  func.func @transform_1(%arg0: i32) -> (i32, i32, i32) {
    %c0_i32 = arith.constant 0 : i32
    %c0_i32_0 = arith.constant 0 : i32
    %c0_i32_1 = arith.constant 0 : i32
    return %arg0, %c0_i32, %c0_i32_0 : i32, i32, i32
  }
  func.func @transform_2(%arg0: i32) -> (i32, i32, i32) {
    %c0_i32 = arith.constant 0 : i32
    %c0_i32_0 = arith.constant 0 : i32
    %c0_i32_1 = arith.constant 0 : i32
    return %arg0, %c0_i32, %c0_i32_0 : i32, i32, i32
  }
  func.func @transform_3(%arg0: i32) -> (i32, i32, i32) {
    %c0_i32 = arith.constant 0 : i32
    %c0_i32_0 = arith.constant 0 : i32
    %c0_i32_1 = arith.constant 0 : i32
    return %arg0, %c0_i32, %c0_i32_0 : i32, i32, i32
  }
}

</mosaic_0001>

<llo_original>
// kernel: ssd_loss_neg.1
$region0: #{ssd_loss_neg.1}
  #allocation0 [shape = 'u32[]', space=smem, size = 0x4, offset = 0x4, fixed_abs, tag = 'smem constant byte address 0x4 - core index']
  #allocation1 [shape = 'u32[72,128]{1,0:T(1,128)}', space=vmem, size = 0x9000, scoped, tag = 'internal scratch']
  #allocation2 [shape = 'f32[128,8]{1,0:T(8,128)}', space=vmem, size = 0x10000, scoped, tag = 'scratch operand']
  %s0 = inlined_call_operand.vmem [shape: f32[8,8,128], index: 0, kind: input, shape index: {}]
  %s1 = inlined_call_operand.vmem [shape: f32[8,16,128], index: 1, kind: input, shape index: {}]
  %s2 = inlined_call_operand.vmem [shape: s32[8,1,128], index: 2, kind: input, shape index: {}]
  %s3 = inlined_call_operand.vmem [shape: f32[8,2,128], index: 3, kind: output, shape index: {}]
  %s4 = sld [smem:[#allocation0]]
  $region73: #{ssd_loss_neg.1} parent=0
    _
  %s6 = ssub.s32 1, %s4
  %s7 = scalar_select 0, %s6, %s4
  loop: start=0, step=1, limit=4
  $region2: #{ssd_loss_neg.1} parent=0 // loop_pre_header
    _
  $region3: #{ssd_loss_neg.1} parent=0 // loop_header
    %s9 = sphi 0, %s13
    %p10 = scmp.ge.s32.totalorder %s9, 4
    %s19 = sphi 0, %s21
    %s22 = sphi 0, %s19
    %s23 = sphi 0, %s22
    %s39 = sphi 0, %s23
    %s45 = sphi 0, %s47
    %s48 = sphi 0, %s45
    %s49 = sphi 0, %s48
    %s65 = sphi 0, %s49
    %s71 = sphi 0, %s73
    %s74 = sphi 0, %s71
    %s75 = sphi 0, %s74
    %s91 = sphi 0, %s75
    %s97 = sphi 0, %s99
    %s100 = sphi 0, %s97
    %s101 = sphi 0, %s100
    %s117 = sphi 0, %s101
  $region4: #{ssd_loss_neg.1} parent=0 // loop_header_branch
    %12 = sbr.rel (%p10) target = $region8
  $region5: #{ssd_loss_neg.1} parent=0 // loop_body
    %s14 = ssub.s32 %s9, 1
    %s15 = ssub.s32 %s9, 2
    %s16 = sadd.s32 %s9, 1
    %s17 = ssub.s32 %s9, %s16
    %p18 = scmp.eq.s32.totalorder %s17, 0
    %s20 = sadd.s32 %s19, 1
    %s21 = scalar_select %p18, %s19, %s20
    %p24 = pneg %p18
    %p25 = scmp.eq.s32.totalorder %s9, 1
    %p26 = por %p24, %p25
    %p27 = scmp.ne.s32.totalorder %s19, %s22
    %p28 = scmp.eq.s32.totalorder %s9, 0
    %p29 = por %p27, %p28
    %p30 = scmp.ne.s32.totalorder %s19, %s22
    %p31 = scmp.eq.s32.totalorder %s14, 1
    %p32 = por %p30, %p31
    %p33 = scmp.ne.s32.totalorder %s22, %s23
    %p34 = scmp.eq.s32.totalorder %s14, 0
    %p35 = por %p33, %p34
    %p36 = scmp.ne.s32.totalorder %s22, %s23
    %p37 = scmp.eq.s32.totalorder %s15, 1
    %p38 = por %p36, %p37
    %p40 = scmp.ne.s32.totalorder %s23, %s39
    %p41 = scmp.eq.s32.totalorder %s15, 0
    %p42 = por %p40, %p41
    %s43 = ssub.s32 %s9, %s16
    %p44 = scmp.eq.s32.totalorder %s43, 0
    %s46 = sadd.s32 %s45, 1
    %s47 = scalar_select %p44, %s45, %s46
    %p50 = pneg %p44
    %p51 = scmp.eq.s32.totalorder %s9, 1
    %p52 = por %p50, %p51
    %p53 = scmp.ne.s32.totalorder %s45, %s48
    %p54 = scmp.eq.s32.totalorder %s9, 0
    %p55 = por %p53, %p54
    %p56 = scmp.ne.s32.totalorder %s45, %s48
    %p57 = scmp.eq.s32.totalorder %s14, 1
    %p58 = por %p56, %p57
    %p59 = scmp.ne.s32.totalorder %s48, %s49
    %p60 = scmp.eq.s32.totalorder %s14, 0
    %p61 = por %p59, %p60
    %p62 = scmp.ne.s32.totalorder %s48, %s49
    %p63 = scmp.eq.s32.totalorder %s15, 1
    %p64 = por %p62, %p63
    %p66 = scmp.ne.s32.totalorder %s49, %s65
    %p67 = scmp.eq.s32.totalorder %s15, 0
    %p68 = por %p66, %p67
    %s69 = ssub.s32 %s9, %s16
    %p70 = scmp.eq.s32.totalorder %s69, 0
    %s72 = sadd.s32 %s71, 1
    %s73 = scalar_select %p70, %s71, %s72
    %p76 = pneg %p70
    %p77 = scmp.eq.s32.totalorder %s9, 1
    %p78 = por %p76, %p77
    %p79 = scmp.ne.s32.totalorder %s71, %s74
    %p80 = scmp.eq.s32.totalorder %s9, 0
    %p81 = por %p79, %p80
    %p82 = scmp.ne.s32.totalorder %s71, %s74
    %p83 = scmp.eq.s32.totalorder %s14, 1
    %p84 = por %p82, %p83
    %p85 = scmp.ne.s32.totalorder %s74, %s75
    %p86 = scmp.eq.s32.totalorder %s14, 0
    %p87 = por %p85, %p86
    %p88 = scmp.ne.s32.totalorder %s74, %s75
    %p89 = scmp.eq.s32.totalorder %s15, 1
    %p90 = por %p88, %p89
    %p92 = scmp.ne.s32.totalorder %s75, %s91
    %p93 = scmp.eq.s32.totalorder %s15, 0
    %p94 = por %p92, %p93
    %s95 = ssub.s32 %s9, %s16
    %p96 = scmp.eq.s32.totalorder %s95, 0
    %s98 = sadd.s32 %s97, 1
    %s99 = scalar_select %p96, %s97, %s98
    %p102 = pneg %p96
    %p103 = scmp.eq.s32.totalorder %s9, 1
    %p104 = por %p102, %p103
    %p105 = scmp.ne.s32.totalorder %s97, %s100
    %p106 = scmp.eq.s32.totalorder %s9, 0
    %p107 = por %p105, %p106
    %p108 = scmp.ne.s32.totalorder %s97, %s100
    %p109 = scmp.eq.s32.totalorder %s14, 1
    %p110 = por %p108, %p109
    %p111 = scmp.ne.s32.totalorder %s100, %s101
    %p112 = scmp.eq.s32.totalorder %s14, 0
    %p113 = por %p111, %p112
    %p114 = scmp.ne.s32.totalorder %s100, %s101
    %p115 = scmp.eq.s32.totalorder %s15, 1
    %p116 = por %p114, %p115
    %p118 = scmp.ne.s32.totalorder %s101, %s117
    %p119 = scmp.eq.s32.totalorder %s15, 0
    %p120 = por %p118, %p119
    %p121 = scmp.le.s32.totalorder 1, %s9
    %p122 = scmp.lt.s32.totalorder %s9, 3
    %p123 = pnand %p121, %p122
    %p124 = pneg %p123
    // Predicated region
    $region9: #{ssd_loss_neg.1} parent=5 // pred_check
      _
    $region10: #{ssd_loss_neg.1} parent=5 // pred_check_branch
      %126 = sbr.rel (%p123) target = $region12
    $region11: #{ssd_loss_neg.1} parent=5 // pred_region
      %s127 = ssub.s32 %s9, 1
    $region12: #{ssd_loss_neg.1} parent=5 // pred_fallthru
      _
    %p128 = scmp.lt.s32.totalorder %s9, 2
    // Predicated region
    $region13: #{ssd_loss_neg.1} parent=5 // pred_check
      %p129 = pneg %p128
    $region14: #{ssd_loss_neg.1} parent=5 // pred_check_branch
      %131 = sbr.rel (%p129) target = $region16
    $region15: #{ssd_loss_neg.1} parent=5 // pred_region
      // Predicated region
      $region17: #{ssd_loss_neg.1} parent=15 // pred_check
        %p132 = pneg %p29
      $region18: #{ssd_loss_neg.1} parent=15 // pred_check_branch
        %134 = sbr.rel (%p132) target = $region20
      $region19: #{ssd_loss_neg.1} parent=15 // pred_region
        %s135 = smul.u32 4, %s9
        %p136 = scmp.lt.s32.totalorder %s135, 7
        %s137 = scalar_select %p136, %s135, 7
        %s138 = smul.addr %s137, 8
        %s139 = scalar_lea.vmem %s0, %s138
        %s140 = smul.u32 4, %s9
      $region20: #{ssd_loss_neg.1} parent=15 // pred_fallthru
        _
      // Predicated region
      $region21: #{ssd_loss_neg.1} parent=15 // pred_check
        %p141 = pneg %p55
      $region22: #{ssd_loss_neg.1} parent=15 // pred_check_branch
        %143 = sbr.rel (%p141) target = $region24
      $region23: #{ssd_loss_neg.1} parent=15 // pred_region
        %s144 = smul.u32 4, %s9
        %p145 = scmp.lt.s32.totalorder %s144, 7
        %s146 = scalar_select %p145, %s144, 7
        %s147 = smul.addr %s146, 2
        %s148 = smul.addr %s147, 8
        %s149 = scalar_lea.vmem %s1, %s148
        %s150 = smul.u32 4, %s9
      $region24: #{ssd_loss_neg.1} parent=15 // pred_fallthru
        _
      // Predicated region
      $region25: #{ssd_loss_neg.1} parent=15 // pred_check
        %p151 = pneg %p81
      $region26: #{ssd_loss_neg.1} parent=15 // pred_check_branch
        %153 = sbr.rel (%p151) target = $region28
      $region27: #{ssd_loss_neg.1} parent=15 // pred_region
        %s154 = smul.u32 4, %s9
        %p155 = scmp.lt.s32.totalorder %s154, 7
        %s156 = scalar_select %p155, %s154, 7
        %s157 = scalar_lea.vmem %s2, %s156
        %s158 = smul.u32 4, %s9
      $region28: #{ssd_loss_neg.1} parent=15 // pred_fallthru
        _
    $region16: #{ssd_loss_neg.1} parent=5 // pred_fallthru
      _
    %p159 = scmp.le.s32.totalorder 1, %s9
    %p160 = scmp.lt.s32.totalorder %s9, 3
    %p161 = pnand %p159, %p160
    %p162 = pneg %p161
    // Predicated region
    $region29: #{ssd_loss_neg.1} parent=5 // pred_check
      _
    $region30: #{ssd_loss_neg.1} parent=5 // pred_check_branch
      %164 = sbr.rel (%p161) target = $region32
    $region31: #{ssd_loss_neg.1} parent=5 // pred_region
      %s165 = ssub.s32 %s9, 1
      %s166 = smul.u32 4, %s14
      %p167 = scmp.lt.s32.totalorder %s166, 7
      %s168 = scalar_select %p167, %s166, 7
      %s169 = smul.addr %s168, 8
      %s170 = scalar_lea.vmem %s0, %s169
      %p171 = pneg %p35
      %p172 = pneg %p32
      %s173 = smul.u32 4, %s14
      %p174 = scmp.lt.s32.totalorder %s173, 7
      %s175 = scalar_select %p174, %s173, 7
      %s176 = smul.addr %s175, 2
      %s177 = smul.addr %s176, 8
      %s178 = scalar_lea.vmem %s1, %s177
      %p179 = pneg %p61
      %p180 = pneg %p58
      %s181 = smul.u32 4, %s14
      %p182 = scmp.lt.s32.totalorder %s181, 7
      %s183 = scalar_select %p182, %s181, 7
      %s184 = scalar_lea.vmem %s2, %s183
      %p185 = pneg %p87
      %p186 = pneg %p84
      %p187 = pneg %p113
      %p188 = pneg %p110
      %s189 = smul.u32 4, %s14
      %p190 = scmp.lt.s32.totalorder %s189, 7
      %s191 = scalar_select %p190, %s189, 7
      %s192 = smul.addr %s191, 2
      %s193 = scalar_lea.vmem %s3, %s192
      %s194 = smul.u32 4, %s14
      %p195 = scmp.lt.s32.totalorder %s194, 7
      %s196 = scalar_select %p195, %s194, 7
      %s197 = smul.addr %s196, 8
      %s198 = scalar_lea.vmem %s0, %s197
      %s199 = smul.u32 4, %s14
      %s200 = smul.u32 4, %s14
      %p201 = scmp.lt.s32.totalorder %s200, 7
      %s202 = scalar_select %p201, %s200, 7
      %s203 = smul.addr %s202, 2
      %s204 = smul.addr %s203, 8
      %s205 = scalar_lea.vmem %s1, %s204
      %s206 = smul.u32 4, %s14
      %s207 = smul.u32 4, %s14
      %p208 = scmp.lt.s32.totalorder %s207, 7
      %s209 = scalar_select %p208, %s207, 7
      %s210 = scalar_lea.vmem %s2, %s209
      %s211 = smul.u32 4, %s14
      %s212 = smul.u32 4, %s14
      %p213 = scmp.lt.s32.totalorder %s212, 7
      %s214 = scalar_select %p213, %s212, 7
      %s215 = smul.addr %s214, 2
      %s216 = scalar_lea.vmem %s3, %s215
      %s217 = smul.u32 4, %s14
      %v218 = vld [vmem:[%s210] sm:$0x1]
      %v219 = vld [vmem:[%s210 + $0x1] sm:$0x1]
      %v220 = vld [vmem:[%s210 + $0x2] sm:$0x1]
      %v221 = vld [vmem:[%s210 + $0x3] sm:$0x1]
      %vm222 = vcmp.gt.s32.totalorder %v218, 0
      %vm223 = vcmp.gt.s32.totalorder %v219, 0
      %vm224 = vcmp.gt.s32.totalorder %v220, 0
      %vm225 = vcmp.gt.s32.totalorder %v221, 0
      %v226 = vsel %vm222, 1, 0
      %v227 = vsel %vm223, 1, 0
      %v228 = vsel %vm224, 1, 0
      %v229 = vsel %vm225, 1, 0
      %v230 = vcvt.s32.f32 %v226
      %v231 = vcvt.s32.f32 %v227
      %v232 = vcvt.s32.f32 %v228
      %v233 = vcvt.s32.f32 %v229
      %vm234 = vcmask 1040384
      %v235 = vsel %vm234, %v230, 0.0
      %236 = vadd.xlane.f32.xlu0 %v235
      %v237 = vpop.xlane.xlu0 %236
      %v238 = vsel %vm234, %v231, 0.0
      %239 = vadd.xlane.f32.xlu0 %v238
      %v240 = vpop.xlane.xlu0 %239
      %v241 = vsel %vm234, %v232, 0.0
      %242 = vadd.xlane.f32.xlu0 %v241
      %v243 = vpop.xlane.xlu0 %242
      %v244 = vsel %vm234, %v233, 0.0
      %245 = vadd.xlane.f32.xlu0 %v244
      %v246 = vpop.xlane.xlu0 %245
      %v247 = vld [vmem:[%s198] sm:$0xff]
      %v248 = vld [vmem:[%s198 + $0x8] sm:$0xff]
      %v249 = vld [vmem:[%s198 + $0x10] sm:$0xff]
      %v250 = vld [vmem:[%s198 + $0x18] sm:$0xff]
      %v255 = vrot.slane %v247, 4
      %v256 = vrot.slane %v248, 4
      %v257 = vrot.slane %v249, 4
      %v258 = vrot.slane %v250, 4
      %v263 = vsub.f32 %v247, %v255
      %v264 = vsub.f32 %v248, %v256
      %v265 = vsub.f32 %v249, %v257
      %v266 = vsub.f32 %v250, %v258
      %vm267 = vcmp.eq.s32.totalorder %v218, 0
      %vm268 = vcmp.eq.s32.totalorder %v219, 0
      %vm269 = vcmp.eq.s32.totalorder %v220, 0
      %vm270 = vcmp.eq.s32.totalorder %v221, 0
      %v271 = vsel %vm267, 1, 0
      %v272 = vsel %vm268, 1, 0
      %v273 = vsel %vm269, 1, 0
      %v274 = vsel %vm270, 1, 0
      %v275 = vperm.slane %v271, 0
      %v276 = vperm.slane %v272, 0
      %v277 = vperm.slane %v273, 0
      %v278 = vperm.slane %v274, 0
      %279 = vset.pattern.permute.xlu0 0
      %280 = vperm.xlu0 %279, %v275
      %v281 = vpop.permute.xlu0 %280
      %282 = vset.pattern.permute.xlu0 0
      %283 = vperm.xlu0 %282, %v276
      %v284 = vpop.permute.xlu0 %283
      %285 = vset.pattern.permute.xlu0 0
      %286 = vperm.xlu0 %285, %v277
      %v287 = vpop.permute.xlu0 %286
      %288 = vset.pattern.permute.xlu0 0
      %289 = vperm.xlu0 %288, %v278
      %v290 = vpop.permute.xlu0 %289
      %vm291 = vcmp.eq.s32.totalorder %v281, 1
      %vm292 = vcmp.eq.s32.totalorder %v284, 1
      %vm293 = vcmp.eq.s32.totalorder %v287, 1
      %vm294 = vcmp.eq.s32.totalorder %v290, 1
      %v295 = vsel %vm291, 0.0, %v263
      %v296 = vsel %vm292, 0.0, %v264
      %v297 = vsel %vm293, 0.0, %v265
      %v298 = vsel %vm294, 0.0, %v266
      %v299 = vand.u32 2147483647, %v295
      %v300 = vand.u32 2147483647, %v296
      %v301 = vand.u32 2147483647, %v297
      %v302 = vand.u32 2147483647, %v298
      %vm303 = vcmp.lt.f32.partialorder %v299, 1.0
      %vm304 = vcmp.lt.f32.partialorder %v300, 1.0
      %vm305 = vcmp.lt.f32.partialorder %v301, 1.0
      %vm306 = vcmp.lt.f32.partialorder %v302, 1.0
      %v307 = vmul.f32 %v295, 0.5
      %v308 = vmul.f32 %v296, 0.5
      %v309 = vmul.f32 %v297, 0.5
      %v310 = vmul.f32 %v298, 0.5
      %v311 = vmul.f32 %v307, %v295
      %v312 = vmul.f32 %v308, %v296
      %v313 = vmul.f32 %v309, %v297
      %v314 = vmul.f32 %v310, %v298
      %v315 = vsub.f32 %v299, 0.5
      %v316 = vsub.f32 %v300, 0.5
      %v317 = vsub.f32 %v301, 0.5
      %v318 = vsub.f32 %v302, 0.5
      %v319 = vsel %vm303, %v311, %v315
      %v320 = vsel %vm304, %v312, %v316
      %v321 = vsel %vm305, %v313, %v317
      %v322 = vsel %vm306, %v314, %v318
      %vm323 = vcmask 1043456
      %v324 = vsel %vm323, %v319, 0.0
      %v325 = vrot.slane %v324, 4
      %v326 = vadd.f32 %v324, %v325
      %v327 = vrot.slane %v326, 2
      %v328 = vadd.f32 %v326, %v327
      %v329 = vrot.slane %v328, 1
      %v330 = vadd.f32 %v328, %v329
      %v331 = vsel %vm323, %v320, 0.0
      %v332 = vrot.slane %v331, 4
      %v333 = vadd.f32 %v331, %v332
      %v334 = vrot.slane %v333, 2
      %v335 = vadd.f32 %v333, %v334
      %v336 = vrot.slane %v335, 1
      %v337 = vadd.f32 %v335, %v336
      %v338 = vsel %vm323, %v321, 0.0
      %v339 = vrot.slane %v338, 4
      %v340 = vadd.f32 %v338, %v339
      %v341 = vrot.slane %v340, 2
      %v342 = vadd.f32 %v340, %v341
      %v343 = vrot.slane %v342, 1
      %v344 = vadd.f32 %v342, %v343
      %v345 = vsel %vm323, %v322, 0.0
      %v346 = vrot.slane %v345, 4
      %v347 = vadd.f32 %v345, %v346
      %v348 = vrot.slane %v347, 2
      %v349 = vadd.f32 %v347, %v348
      %v350 = vrot.slane %v349, 1
      %v351 = vadd.f32 %v349, %v350
      %v352 = vmul.f32 %v330, %v230
      %v353 = vmul.f32 %v337, %v231
      %v354 = vmul.f32 %v344, %v232
      %v355 = vmul.f32 %v351, %v233
      %v356 = vld [vmem:[%s205] sm:$0xff]
      %v357 = vld [vmem:[%s205 + $0x8] sm:$0xff]
      %v358 = vld [vmem:[%s205 + $0x10] sm:$0xff]
      %v359 = vld [vmem:[%s205 + $0x18] sm:$0xff]
      %v360 = vld [vmem:[%s205 + $0x20] sm:$0xff]
      %v361 = vld [vmem:[%s205 + $0x28] sm:$0xff]
      %v362 = vld [vmem:[%s205 + $0x30] sm:$0xff]
      %v363 = vld [vmem:[%s205 + $0x38] sm:$0xff]
      %v364 = vmax.f32 %v356, %v357
      %v365 = vrot.slane %v364, 4
      %v366 = vmax.f32 %v364, %v365
      %v367 = vrot.slane %v366, 2
      %v368 = vmax.f32 %v366, %v367
      %v369 = vrot.slane %v368, 1
      %v370 = vmax.f32 %v368, %v369
      %v371 = vmax.f32 %v358, %v359
      %v372 = vrot.slane %v371, 4
      %v373 = vmax.f32 %v371, %v372
      %v374 = vrot.slane %v373, 2
      %v375 = vmax.f32 %v373, %v374
      %v376 = vrot.slane %v375, 1
      %v377 = vmax.f32 %v375, %v376
      %v378 = vmax.f32 %v360, %v361
      %v379 = vrot.slane %v378, 4
      %v380 = vmax.f32 %v378, %v379
      %v381 = vrot.slane %v380, 2
      %v382 = vmax.f32 %v380, %v381
      %v383 = vrot.slane %v382, 1
      %v384 = vmax.f32 %v382, %v383
      %v385 = vmax.f32 %v362, %v363
      %v386 = vrot.slane %v385, 4
      %v387 = vmax.f32 %v385, %v386
      %v388 = vrot.slane %v387, 2
      %v389 = vmax.f32 %v387, %v388
      %v390 = vrot.slane %v389, 1
      %v391 = vmax.f32 %v389, %v390
      %v392 = vsub.f32 %v356, %v370
      %v393 = vsub.f32 %v357, %v370
      %v394 = vsub.f32 %v358, %v377
      %v395 = vsub.f32 %v359, %v377
      %v396 = vsub.f32 %v360, %v384
      %v397 = vsub.f32 %v361, %v384
      %v398 = vsub.f32 %v362, %v391
      %v399 = vsub.f32 %v363, %v391
      %v400 = vmul.f32 %v392, 1.442695
      %v401 = vpow.pop %v400
      %v402 = vmul.f32 %v393, 1.442695
      %v403 = vpow.pop %v402
      %v404 = vmul.f32 %v394, 1.442695
      %v405 = vpow.pop %v404
      %v406 = vmul.f32 %v395, 1.442695
      %v407 = vpow.pop %v406
      %v408 = vmul.f32 %v396, 1.442695
      %v409 = vpow.pop %v408
      %v410 = vmul.f32 %v397, 1.442695
      %v411 = vpow.pop %v410
      %v412 = vmul.f32 %v398, 1.442695
      %v413 = vpow.pop %v412
      %v414 = vmul.f32 %v399, 1.442695
      %v415 = vpow.pop %v414
      %v416 = vadd.f32 %v401, %v403
      %v417 = vrot.slane %v416, 4
      %v418 = vadd.f32 %v416, %v417
      %v419 = vrot.slane %v418, 2
      %v420 = vadd.f32 %v418, %v419
      %v421 = vrot.slane %v420, 1
      %v422 = vadd.f32 %v420, %v421
      %v423 = vadd.f32 %v405, %v407
      %v424 = vrot.slane %v423, 4
      %v425 = vadd.f32 %v423, %v424
      %v426 = vrot.slane %v425, 2
      %v427 = vadd.f32 %v425, %v426
      %v428 = vrot.slane %v427, 1
      %v429 = vadd.f32 %v427, %v428
      %v430 = vadd.f32 %v409, %v411
      %v431 = vrot.slane %v430, 4
      %v432 = vadd.f32 %v430, %v431
      %v433 = vrot.slane %v432, 2
      %v434 = vadd.f32 %v432, %v433
      %v435 = vrot.slane %v434, 1
      %v436 = vadd.f32 %v434, %v435
      %v437 = vadd.f32 %v413, %v415
      %v438 = vrot.slane %v437, 4
      %v439 = vadd.f32 %v437, %v438
      %v440 = vrot.slane %v439, 2
      %v441 = vadd.f32 %v439, %v440
      %v442 = vrot.slane %v441, 1
      %v443 = vadd.f32 %v441, %v442
      %v444 = vlog2.pop %v422
      %v445 = vmul.f32 %v444, 0.6931472
      %v446 = vlog2.pop %v429
      %v447 = vmul.f32 %v446, 0.6931472
      %v448 = vlog2.pop %v436
      %v449 = vmul.f32 %v448, 0.6931472
      %v450 = vlog2.pop %v443
      %v451 = vmul.f32 %v450, 0.6931472
      %v452 = vadd.f32 %v445, %v370
      %v453 = vadd.f32 %v447, %v377
      %v454 = vadd.f32 %v449, %v384
      %v455 = vadd.f32 %v451, %v391
      %v456 = vlaneseq
      %v457 = vshrl.u32 %v456, 7
      %v458 = vadd.s32 %v457, 8
      %vm459 = vcmp.gt.s32.totalorder %v218, 0
      %v460 = vsel %vm459, %v218, 0
      %vm461 = vcmp.gt.s32.totalorder %v219, 0
      %v462 = vsel %vm461, %v219, 0
      %vm463 = vcmp.gt.s32.totalorder %v220, 0
      %v464 = vsel %vm463, %v220, 0
      %vm465 = vcmp.gt.s32.totalorder %v221, 0
      %v466 = vsel %vm465, %v221, 0
      %v467 = vperm.slane %v460, 0
      %v468 = vperm.slane %v462, 0
      %v469 = vperm.slane %v464, 0
      %v470 = vperm.slane %v466, 0
      %vm471 = vcmp.eq.s32.totalorder %v457, %v467
      %vm472 = vcmp.eq.s32.totalorder %v458, %v467
      %vm473 = vcmp.eq.s32.totalorder %v457, %v468
      %vm474 = vcmp.eq.s32.totalorder %v458, %v468
      %vm475 = vcmp.eq.s32.totalorder %v457, %v469
      %vm476 = vcmp.eq.s32.totalorder %v458, %v469
      %vm477 = vcmp.eq.s32.totalorder %v457, %v470
      %vm478 = vcmp.eq.s32.totalorder %v458, %v470
      %v479 = vsel %vm471, %v356, 0.0
      %v480 = vsel %vm472, %v357, 0.0
      %v481 = vsel %vm473, %v358, 0.0
      %v482 = vsel %vm474, %v359, 0.0
      %v483 = vsel %vm475, %v360, 0.0
      %v484 = vsel %vm476, %v361, 0.0
      %v485 = vsel %vm477, %v362, 0.0
      %v486 = vsel %vm478, %v363, 0.0
      %v487 = vadd.f32 %v479, %v480
      %v488 = vrot.slane %v487, 4
      %v489 = vadd.f32 %v487, %v488
      %v490 = vrot.slane %v489, 2
      %v491 = vadd.f32 %v489, %v490
      %v492 = vrot.slane %v491, 1
      %v493 = vadd.f32 %v491, %v492
      %v494 = vadd.f32 %v481, %v482
      %v495 = vrot.slane %v494, 4
      %v496 = vadd.f32 %v494, %v495
      %v497 = vrot.slane %v496, 2
      %v498 = vadd.f32 %v496, %v497
      %v499 = vrot.slane %v498, 1
      %v500 = vadd.f32 %v498, %v499
      %v501 = vadd.f32 %v483, %v484
      %v502 = vrot.slane %v501, 4
      %v503 = vadd.f32 %v501, %v502
      %v504 = vrot.slane %v503, 2
      %v505 = vadd.f32 %v503, %v504
      %v506 = vrot.slane %v505, 1
      %v507 = vadd.f32 %v505, %v506
      %v508 = vadd.f32 %v485, %v486
      %v509 = vrot.slane %v508, 4
      %v510 = vadd.f32 %v508, %v509
      %v511 = vrot.slane %v510, 2
      %v512 = vadd.f32 %v510, %v511
      %v513 = vrot.slane %v512, 1
      %v514 = vadd.f32 %v512, %v513
      %vm515 = vcmp.lt.s32.totalorder %v218, 0
      %vm516 = vcmp.lt.s32.totalorder %v219, 0
      %vm517 = vcmp.lt.s32.totalorder %v220, 0
      %vm518 = vcmp.lt.s32.totalorder %v221, 0
      %v519 = vsub.f32 %v452, %v493
      %v520 = vsub.f32 %v453, %v500
      %v521 = vsub.f32 %v454, %v507
      %v522 = vsub.f32 %v455, %v514
      %v523 = vsel %vm515, 0.0, %v519
      %v524 = vsel %vm516, 0.0, %v520
      %v525 = vsel %vm517, 0.0, %v521
      %v526 = vsel %vm518, 0.0, %v522
      %v527 = vsub.f32 %v230, 1.0
      %v528 = vsub.f32 %v231, 1.0
      %v529 = vsub.f32 %v232, 1.0
      %v530 = vsub.f32 %v233, 1.0
      %v531 = vmul.f32 %v523, %v527
      %v532 = vmul.f32 %v524, %v528
      %v533 = vmul.f32 %v525, %v529
      %v534 = vmul.f32 %v526, %v530
      %v535 = vlaneseq
      %v536 = vand.u32 %v535, 127
      %v538 = vperm.slane %v531, 0
      %540 = vxpose.xlu0.b32.start [1/16] %v538, 128
      %541 = vxpose.xlu0.b32.cont [2/16] 0.0, 128
      %542 = vxpose.xlu0.b32.cont [3/16] 0.0, 128
      %543 = vxpose.xlu0.b32.cont [4/16] 0.0, 128
      %544 = vxpose.xlu0.b32.cont [5/16] 0.0, 128
      %545 = vxpose.xlu0.b32.cont [6/16] 0.0, 128
      %546 = vxpose.xlu0.b32.cont [7/16] 0.0, 128
      %547 = vxpose.xlu0.b32.cont [8/16] 0.0, 128
      %548 = vxpose.xlu0.b32.cont [9/16] 0.0, 128
      %549 = vxpose.xlu0.b32.cont [10/16] 0.0, 128
      %550 = vxpose.xlu0.b32.cont [11/16] 0.0, 128
      %551 = vxpose.xlu0.b32.cont [12/16] 0.0, 128
      %552 = vxpose.xlu0.b32.cont [13/16] 0.0, 128
      %553 = vxpose.xlu0.b32.cont [14/16] 0.0, 128
      %554 = vxpose.xlu0.b32.cont [15/16] 0.0, 128
      %555 = vxpose.xlu0.b32.end [16/16] 0.0, 128
      %v556 = vpop.trf.xlu0
      %v557 = vpop.trf.xlu0
      %v558 = vpop.trf.xlu0
      %v559 = vpop.trf.xlu0
      %v560 = vpop.trf.xlu0
      %v561 = vpop.trf.xlu0
      %v562 = vpop.trf.xlu0
      %v563 = vpop.trf.xlu0
      %v564 = vpop.trf.xlu0
      %v565 = vpop.trf.xlu0
      %v566 = vpop.trf.xlu0
      %v567 = vpop.trf.xlu0
      %v568 = vpop.trf.xlu0
      %v569 = vpop.trf.xlu0
      %v570 = vpop.trf.xlu0
      %v571 = vpop.trf.xlu0
      %vm572 = vcmask 64512
      %573 = vst.msk [vmem:[#allocation2] sm:$0xff] %vm572, %v556
      %574 = vst.msk [vmem:[#allocation2 + $0x8] sm:$0xff] %vm572, %v557
      %575 = vst.msk [vmem:[#allocation2 + $0x10] sm:$0xff] %vm572, %v558
      %576 = vst.msk [vmem:[#allocation2 + $0x18] sm:$0xff] %vm572, %v559
      %577 = vst.msk [vmem:[#allocation2 + $0x20] sm:$0xff] %vm572, %v560
      %578 = vst.msk [vmem:[#allocation2 + $0x28] sm:$0xff] %vm572, %v561
      %579 = vst.msk [vmem:[#allocation2 + $0x30] sm:$0xff] %vm572, %v562
      %580 = vst.msk [vmem:[#allocation2 + $0x38] sm:$0xff] %vm572, %v563
      %581 = vst.msk [vmem:[#allocation2 + $0x40] sm:$0xff] %vm572, %v564
      %582 = vst.msk [vmem:[#allocation2 + $0x48] sm:$0xff] %vm572, %v565
      %583 = vst.msk [vmem:[#allocation2 + $0x50] sm:$0xff] %vm572, %v566
      %584 = vst.msk [vmem:[#allocation2 + $0x58] sm:$0xff] %vm572, %v567
      %585 = vst.msk [vmem:[#allocation2 + $0x60] sm:$0xff] %vm572, %v568
      %586 = vst.msk [vmem:[#allocation2 + $0x68] sm:$0xff] %vm572, %v569
      %587 = vst.msk [vmem:[#allocation2 + $0x70] sm:$0xff] %vm572, %v570
      %588 = vst.msk [vmem:[#allocation2 + $0x78] sm:$0xff] %vm572, %v571
      loop: start=0, step=1, limit=16
      $region33: #{ssd_loss_neg.1} parent=31 // loop_pre_header
        _
      $region34: #{ssd_loss_neg.1} parent=31 // loop_header
        %s590 = sphi 0, %s594
        %p591 = scmp.ge.s32.totalorder %s590, 16
        %v595 = vphi 0.0, %v619
      $region35: #{ssd_loss_neg.1} parent=31 // loop_header_branch
        %593 = sbr.rel (%p591) target = $region39
      $region36: #{ssd_loss_neg.1} parent=31 // loop_body
        %s596 = smul.u32 %s590, 8
        %s597 = scalar_lea.vmem [#allocation2], %s596
        %v598 = vld [vmem:[%s597] sm:$0xff]
        %600 = vset.pattern.permute.xlu0 0
        %601 = vperm.xlu0 %600, %v598
        %v602 = vpop.permute.xlu0 %601
        %v604 = vstv %s596
        %v605 = vadd.s32 %v457, %v604
        %vm606 = vcmp.lt.f32.partialorder %v602, %v538
        %vm607 = vcmp.eq.f32.partialorder %v602, %v538
        %vm608 = vcmp.lt.s32.totalorder %v605, %v536
        %vm609 = vmand %vm607, %vm608
        %vm610 = vmor %vm606, %vm609
        %v611 = vsel %vm610, 1, 0
        %v612 = vcvt.s32.f32 %v611
        %v613 = vrot.slane %v612, 4
        %v614 = vadd.f32 %v612, %v613
        %v615 = vrot.slane %v614, 2
        %v616 = vadd.f32 %v614, %v615
        %v617 = vrot.slane %v616, 1
        %v618 = vadd.f32 %v616, %v617
        %v619 = vadd.f32 %v595, %v618
      $region37: #{ssd_loss_neg.1} parent=31 // loop_footer
        %s594 = sadd.s32 1, %s590
      $region38: #{ssd_loss_neg.1} parent=31 // loop_footer_branch
        %589 = sbr.rel target = $region34
      $region39: #{ssd_loss_neg.1} parent=31 // loop_exit
        _
      %v620 = vmul.f32 %v237, 3.0
      %vm621 = vcmp.lt.f32.partialorder %v595, %v620
      %vm622 = vmor %vm222, %vm621
      %v623 = vsel %vm622, %v523, 0.0
      %v624 = vadd.f32 %v352, %v623
      %v625 = vsel %vm234, %v624, 0.0
      %626 = vadd.xlane.f32.xlu0 %v625
      %v627 = vpop.xlane.xlu0 %626
      %v629 = vrot.slane %v237, 7
      %v631 = vsel %vm234, %v627, %v629
      %632 = vst [vmem:[%s216] sm:$0x3] %v631
      %v634 = vperm.slane %v532, 0
      %636 = vxpose.xlu0.b32.start [1/16] %v634, 128
      %637 = vxpose.xlu0.b32.cont [2/16] 0.0, 128
      %638 = vxpose.xlu0.b32.cont [3/16] 0.0, 128
      %639 = vxpose.xlu0.b32.cont [4/16] 0.0, 128
      %640 = vxpose.xlu0.b32.cont [5/16] 0.0, 128
      %641 = vxpose.xlu0.b32.cont [6/16] 0.0, 128
      %642 = vxpose.xlu0.b32.cont [7/16] 0.0, 128
      %643 = vxpose.xlu0.b32.cont [8/16] 0.0, 128
      %644 = vxpose.xlu0.b32.cont [9/16] 0.0, 128
      %645 = vxpose.xlu0.b32.cont [10/16] 0.0, 128
      %646 = vxpose.xlu0.b32.cont [11/16] 0.0, 128
      %647 = vxpose.xlu0.b32.cont [12/16] 0.0, 128
      %648 = vxpose.xlu0.b32.cont [13/16] 0.0, 128
      %649 = vxpose.xlu0.b32.cont [14/16] 0.0, 128
      %650 = vxpose.xlu0.b32.cont [15/16] 0.0, 128
      %651 = vxpose.xlu0.b32.end [16/16] 0.0, 128
      %v652 = vpop.trf.xlu0
      %v653 = vpop.trf.xlu0
      %v654 = vpop.trf.xlu0
      %v655 = vpop.trf.xlu0
      %v656 = vpop.trf.xlu0
      %v657 = vpop.trf.xlu0
      %v658 = vpop.trf.xlu0
      %v659 = vpop.trf.xlu0
      %v660 = vpop.trf.xlu0
      %v661 = vpop.trf.xlu0
      %v662 = vpop.trf.xlu0
      %v663 = vpop.trf.xlu0
      %v664 = vpop.trf.xlu0
      %v665 = vpop.trf.xlu0
      %v666 = vpop.trf.xlu0
      %v667 = vpop.trf.xlu0
      %668 = vst.msk [vmem:[#allocation2] sm:$0xff] %vm572, %v652
      %669 = vst.msk [vmem:[#allocation2 + $0x8] sm:$0xff] %vm572, %v653
      %670 = vst.msk [vmem:[#allocation2 + $0x10] sm:$0xff] %vm572, %v654
      %671 = vst.msk [vmem:[#allocation2 + $0x18] sm:$0xff] %vm572, %v655
      %672 = vst.msk [vmem:[#allocation2 + $0x20] sm:$0xff] %vm572, %v656
      %673 = vst.msk [vmem:[#allocation2 + $0x28] sm:$0xff] %vm572, %v657
      %674 = vst.msk [vmem:[#allocation2 + $0x30] sm:$0xff] %vm572, %v658
      %675 = vst.msk [vmem:[#allocation2 + $0x38] sm:$0xff] %vm572, %v659
      %676 = vst.msk [vmem:[#allocation2 + $0x40] sm:$0xff] %vm572, %v660
      %677 = vst.msk [vmem:[#allocation2 + $0x48] sm:$0xff] %vm572, %v661
      %678 = vst.msk [vmem:[#allocation2 + $0x50] sm:$0xff] %vm572, %v662
      %679 = vst.msk [vmem:[#allocation2 + $0x58] sm:$0xff] %vm572, %v663
      %680 = vst.msk [vmem:[#allocation2 + $0x60] sm:$0xff] %vm572, %v664
      %681 = vst.msk [vmem:[#allocation2 + $0x68] sm:$0xff] %vm572, %v665
      %682 = vst.msk [vmem:[#allocation2 + $0x70] sm:$0xff] %vm572, %v666
      %683 = vst.msk [vmem:[#allocation2 + $0x78] sm:$0xff] %vm572, %v667
      loop: start=0, step=1, limit=16
      $region40: #{ssd_loss_neg.1} parent=31 // loop_pre_header
        _
      $region41: #{ssd_loss_neg.1} parent=31 // loop_header
        %s685 = sphi 0, %s689
        %p686 = scmp.ge.s32.totalorder %s685, 16
        %v690 = vphi 0.0, %v714
      $region42: #{ssd_loss_neg.1} parent=31 // loop_header_branch
        %688 = sbr.rel (%p686) target = $region46
      $region43: #{ssd_loss_neg.1} parent=31 // loop_body
        %s691 = smul.u32 %s685, 8
        %s692 = scalar_lea.vmem [#allocation2], %s691
        %v693 = vld [vmem:[%s692] sm:$0xff]
        %695 = vset.pattern.permute.xlu0 0
        %696 = vperm.xlu0 %695, %v693
        %v697 = vpop.permute.xlu0 %696
        %v699 = vstv %s691
        %v700 = vadd.s32 %v457, %v699
        %vm701 = vcmp.lt.f32.partialorder %v697, %v634
        %vm702 = vcmp.eq.f32.partialorder %v697, %v634
        %vm703 = vcmp.lt.s32.totalorder %v700, %v536
        %vm704 = vmand %vm702, %vm703
        %vm705 = vmor %vm701, %vm704
        %v706 = vsel %vm705, 1, 0
        %v707 = vcvt.s32.f32 %v706
        %v708 = vrot.slane %v707, 4
        %v709 = vadd.f32 %v707, %v708
        %v710 = vrot.slane %v709, 2
        %v711 = vadd.f32 %v709, %v710
        %v712 = vrot.slane %v711, 1
        %v713 = vadd.f32 %v711, %v712
        %v714 = vadd.f32 %v690, %v713
      $region44: #{ssd_loss_neg.1} parent=31 // loop_footer
        %s689 = sadd.s32 1, %s685
      $region45: #{ssd_loss_neg.1} parent=31 // loop_footer_branch
        %684 = sbr.rel target = $region41
      $region46: #{ssd_loss_neg.1} parent=31 // loop_exit
        _
      %v715 = vmul.f32 %v240, 3.0
      %vm716 = vcmp.lt.f32.partialorder %v690, %v715
      %vm717 = vmor %vm223, %vm716
      %v718 = vsel %vm717, %v524, 0.0
      %v719 = vadd.f32 %v353, %v718
      %v720 = vsel %vm234, %v719, 0.0
      %721 = vadd.xlane.f32.xlu0 %v720
      %v722 = vpop.xlane.xlu0 %721
      %v724 = vrot.slane %v240, 7
      %v726 = vsel %vm234, %v722, %v724
      %s727 = scalar_lea.vmem %s216, 2
      %728 = vst [vmem:[%s727] sm:$0x3] %v726
      %v730 = vperm.slane %v533, 0
      %732 = vxpose.xlu0.b32.start [1/16] %v730, 128
      %733 = vxpose.xlu0.b32.cont [2/16] 0.0, 128
      %734 = vxpose.xlu0.b32.cont [3/16] 0.0, 128
      %735 = vxpose.xlu0.b32.cont [4/16] 0.0, 128
      %736 = vxpose.xlu0.b32.cont [5/16] 0.0, 128
      %737 = vxpose.xlu0.b32.cont [6/16] 0.0, 128
      %738 = vxpose.xlu0.b32.cont [7/16] 0.0, 128
      %739 = vxpose.xlu0.b32.cont [8/16] 0.0, 128
      %740 = vxpose.xlu0.b32.cont [9/16] 0.0, 128
      %741 = vxpose.xlu0.b32.cont [10/16] 0.0, 128
      %742 = vxpose.xlu0.b32.cont [11/16] 0.0, 128
      %743 = vxpose.xlu0.b32.cont [12/16] 0.0, 128
      %744 = vxpose.xlu0.b32.cont [13/16] 0.0, 128
      %745 = vxpose.xlu0.b32.cont [14/16] 0.0, 128
      %746 = vxpose.xlu0.b32.cont [15/16] 0.0, 128
      %747 = vxpose.xlu0.b32.end [16/16] 0.0, 128
      %v748 = vpop.trf.xlu0
      %v749 = vpop.trf.xlu0
      %v750 = vpop.trf.xlu0
      %v751 = vpop.trf.xlu0
      %v752 = vpop.trf.xlu0
      %v753 = vpop.trf.xlu0
      %v754 = vpop.trf.xlu0
      %v755 = vpop.trf.xlu0
      %v756 = vpop.trf.xlu0
      %v757 = vpop.trf.xlu0
      %v758 = vpop.trf.xlu0
      %v759 = vpop.trf.xlu0
      %v760 = vpop.trf.xlu0
      %v761 = vpop.trf.xlu0
      %v762 = vpop.trf.xlu0
      %v763 = vpop.trf.xlu0
      %764 = vst.msk [vmem:[#allocation2] sm:$0xff] %vm572, %v748
      %765 = vst.msk [vmem:[#allocation2 + $0x8] sm:$0xff] %vm572, %v749
      %766 = vst.msk [vmem:[#allocation2 + $0x10] sm:$0xff] %vm572, %v750
      %767 = vst.msk [vmem:[#allocation2 + $0x18] sm:$0xff] %vm572, %v751
      %768 = vst.msk [vmem:[#allocation2 + $0x20] sm:$0xff] %vm572, %v752
      %769 = vst.msk [vmem:[#allocation2 + $0x28] sm:$0xff] %vm572, %v753
      %770 = vst.msk [vmem:[#allocation2 + $0x30] sm:$0xff] %vm572, %v754
      %771 = vst.msk [vmem:[#allocation2 + $0x38] sm:$0xff] %vm572, %v755
      %772 = vst.msk [vmem:[#allocation2 + $0x40] sm:$0xff] %vm572, %v756
      %773 = vst.msk [vmem:[#allocation2 + $0x48] sm:$0xff] %vm572, %v757
      %774 = vst.msk [vmem:[#allocation2 + $0x50] sm:$0xff] %vm572, %v758
      %775 = vst.msk [vmem:[#allocation2 + $0x58] sm:$0xff] %vm572, %v759
      %776 = vst.msk [vmem:[#allocation2 + $0x60] sm:$0xff] %vm572, %v760
      %777 = vst.msk [vmem:[#allocation2 + $0x68] sm:$0xff] %vm572, %v761
      %778 = vst.msk [vmem:[#allocation2 + $0x70] sm:$0xff] %vm572, %v762
      %779 = vst.msk [vmem:[#allocation2 + $0x78] sm:$0xff] %vm572, %v763
      loop: start=0, step=1, limit=16
      $region47: #{ssd_loss_neg.1} parent=31 // loop_pre_header
        _
      $region48: #{ssd_loss_neg.1} parent=31 // loop_header
        %s781 = sphi 0, %s785
        %p782 = scmp.ge.s32.totalorder %s781, 16
        %v786 = vphi 0.0, %v810
      $region49: #{ssd_loss_neg.1} parent=31 // loop_header_branch
        %784 = sbr.rel (%p782) target = $region53
      $region50: #{ssd_loss_neg.1} parent=31 // loop_body
        %s787 = smul.u32 %s781, 8
        %s788 = scalar_lea.vmem [#allocation2], %s787
        %v789 = vld [vmem:[%s788] sm:$0xff]
        %791 = vset.pattern.permute.xlu0 0
        %792 = vperm.xlu0 %791, %v789
        %v793 = vpop.permute.xlu0 %792
        %v795 = vstv %s787
        %v796 = vadd.s32 %v457, %v795
        %vm797 = vcmp.lt.f32.partialorder %v793, %v730
        %vm798 = vcmp.eq.f32.partialorder %v793, %v730
        %vm799 = vcmp.lt.s32.totalorder %v796, %v536
        %vm800 = vmand %vm798, %vm799
        %vm801 = vmor %vm797, %vm800
        %v802 = vsel %vm801, 1, 0
        %v803 = vcvt.s32.f32 %v802
        %v804 = vrot.slane %v803, 4
        %v805 = vadd.f32 %v803, %v804
        %v806 = vrot.slane %v805, 2
        %v807 = vadd.f32 %v805, %v806
        %v808 = vrot.slane %v807, 1
        %v809 = vadd.f32 %v807, %v808
        %v810 = vadd.f32 %v786, %v809
      $region51: #{ssd_loss_neg.1} parent=31 // loop_footer
        %s785 = sadd.s32 1, %s781
      $region52: #{ssd_loss_neg.1} parent=31 // loop_footer_branch
        %780 = sbr.rel target = $region48
      $region53: #{ssd_loss_neg.1} parent=31 // loop_exit
        _
      %v811 = vmul.f32 %v243, 3.0
      %vm812 = vcmp.lt.f32.partialorder %v786, %v811
      %vm813 = vmor %vm224, %vm812
      %v814 = vsel %vm813, %v525, 0.0
      %v815 = vadd.f32 %v354, %v814
      %v816 = vsel %vm234, %v815, 0.0
      %817 = vadd.xlane.f32.xlu0 %v816
      %v818 = vpop.xlane.xlu0 %817
      %v820 = vrot.slane %v243, 7
      %v822 = vsel %vm234, %v818, %v820
      %s823 = scalar_lea.vmem %s216, 4
      %824 = vst [vmem:[%s823] sm:$0x3] %v822
      %v826 = vperm.slane %v534, 0
      %828 = vxpose.xlu0.b32.start [1/16] %v826, 128
      %829 = vxpose.xlu0.b32.cont [2/16] 0.0, 128
      %830 = vxpose.xlu0.b32.cont [3/16] 0.0, 128
      %831 = vxpose.xlu0.b32.cont [4/16] 0.0, 128
      %832 = vxpose.xlu0.b32.cont [5/16] 0.0, 128
      %833 = vxpose.xlu0.b32.cont [6/16] 0.0, 128
      %834 = vxpose.xlu0.b32.cont [7/16] 0.0, 128
      %835 = vxpose.xlu0.b32.cont [8/16] 0.0, 128
      %836 = vxpose.xlu0.b32.cont [9/16] 0.0, 128
      %837 = vxpose.xlu0.b32.cont [10/16] 0.0, 128
      %838 = vxpose.xlu0.b32.cont [11/16] 0.0, 128
      %839 = vxpose.xlu0.b32.cont [12/16] 0.0, 128
      %840 = vxpose.xlu0.b32.cont [13/16] 0.0, 128
      %841 = vxpose.xlu0.b32.cont [14/16] 0.0, 128
      %842 = vxpose.xlu0.b32.cont [15/16] 0.0, 128
      %843 = vxpose.xlu0.b32.end [16/16] 0.0, 128
      %v844 = vpop.trf.xlu0
      %v845 = vpop.trf.xlu0
      %v846 = vpop.trf.xlu0
      %v847 = vpop.trf.xlu0
      %v848 = vpop.trf.xlu0
      %v849 = vpop.trf.xlu0
      %v850 = vpop.trf.xlu0
      %v851 = vpop.trf.xlu0
      %v852 = vpop.trf.xlu0
      %v853 = vpop.trf.xlu0
      %v854 = vpop.trf.xlu0
      %v855 = vpop.trf.xlu0
      %v856 = vpop.trf.xlu0
      %v857 = vpop.trf.xlu0
      %v858 = vpop.trf.xlu0
      %v859 = vpop.trf.xlu0
      %860 = vst.msk [vmem:[#allocation2] sm:$0xff] %vm572, %v844
      %861 = vst.msk [vmem:[#allocation2 + $0x8] sm:$0xff] %vm572, %v845
      %862 = vst.msk [vmem:[#allocation2 + $0x10] sm:$0xff] %vm572, %v846
      %863 = vst.msk [vmem:[#allocation2 + $0x18] sm:$0xff] %vm572, %v847
      %864 = vst.msk [vmem:[#allocation2 + $0x20] sm:$0xff] %vm572, %v848
      %865 = vst.msk [vmem:[#allocation2 + $0x28] sm:$0xff] %vm572, %v849
      %866 = vst.msk [vmem:[#allocation2 + $0x30] sm:$0xff] %vm572, %v850
      %867 = vst.msk [vmem:[#allocation2 + $0x38] sm:$0xff] %vm572, %v851
      %868 = vst.msk [vmem:[#allocation2 + $0x40] sm:$0xff] %vm572, %v852
      %869 = vst.msk [vmem:[#allocation2 + $0x48] sm:$0xff] %vm572, %v853
      %870 = vst.msk [vmem:[#allocation2 + $0x50] sm:$0xff] %vm572, %v854
      %871 = vst.msk [vmem:[#allocation2 + $0x58] sm:$0xff] %vm572, %v855
      %872 = vst.msk [vmem:[#allocation2 + $0x60] sm:$0xff] %vm572, %v856
      %873 = vst.msk [vmem:[#allocation2 + $0x68] sm:$0xff] %vm572, %v857
      %874 = vst.msk [vmem:[#allocation2 + $0x70] sm:$0xff] %vm572, %v858
      %875 = vst.msk [vmem:[#allocation2 + $0x78] sm:$0xff] %vm572, %v859
      loop: start=0, step=1, limit=16
      $region54: #{ssd_loss_neg.1} parent=31 // loop_pre_header
        _
      $region55: #{ssd_loss_neg.1} parent=31 // loop_header
        %s877 = sphi 0, %s881
        %p878 = scmp.ge.s32.totalorder %s877, 16
        %v882 = vphi 0.0, %v906
      $region56: #{ssd_loss_neg.1} parent=31 // loop_header_branch
        %880 = sbr.rel (%p878) target = $region60
      $region57: #{ssd_loss_neg.1} parent=31 // loop_body
        %s883 = smul.u32 %s877, 8
        %s884 = scalar_lea.vmem [#allocation2], %s883
        %v885 = vld [vmem:[%s884] sm:$0xff]
        %887 = vset.pattern.permute.xlu0 0
        %888 = vperm.xlu0 %887, %v885
        %v889 = vpop.permute.xlu0 %888
        %v891 = vstv %s883
        %v892 = vadd.s32 %v457, %v891
        %vm893 = vcmp.lt.f32.partialorder %v889, %v826
        %vm894 = vcmp.eq.f32.partialorder %v889, %v826
        %vm895 = vcmp.lt.s32.totalorder %v892, %v536
        %vm896 = vmand %vm894, %vm895
        %vm897 = vmor %vm893, %vm896
        %v898 = vsel %vm897, 1, 0
        %v899 = vcvt.s32.f32 %v898
        %v900 = vrot.slane %v899, 4
        %v901 = vadd.f32 %v899, %v900
        %v902 = vrot.slane %v901, 2
        %v903 = vadd.f32 %v901, %v902
        %v904 = vrot.slane %v903, 1
        %v905 = vadd.f32 %v903, %v904
        %v906 = vadd.f32 %v882, %v905
      $region58: #{ssd_loss_neg.1} parent=31 // loop_footer
        %s881 = sadd.s32 1, %s877
      $region59: #{ssd_loss_neg.1} parent=31 // loop_footer_branch
        %876 = sbr.rel target = $region55
      $region60: #{ssd_loss_neg.1} parent=31 // loop_exit
        _
      %v907 = vmul.f32 %v246, 3.0
      %vm908 = vcmp.lt.f32.partialorder %v882, %v907
      %vm909 = vmor %vm225, %vm908
      %v910 = vsel %vm909, %v526, 0.0
      %v911 = vadd.f32 %v355, %v910
      %v912 = vsel %vm234, %v911, 0.0
      %913 = vadd.xlane.f32.xlu0 %v912
      %v914 = vpop.xlane.xlu0 %913
      %v916 = vrot.slane %v246, 7
      %v918 = vsel %vm234, %v914, %v916
      %s919 = scalar_lea.vmem %s216, 6
      %920 = vst [vmem:[%s919] sm:$0x3] %v918
      %s921 = smul.u32 4, %s14
      %p922 = scmp.lt.s32.totalorder %s921, 7
      %s923 = scalar_select %p922, %s921, 7
      %s924 = smul.addr %s923, 2
      %s925 = scalar_lea.vmem %s3, %s924
      // Predicated region
      $region61: #{ssd_loss_neg.1} parent=31 // pred_check
        %p926 = pneg %p110
      $region62: #{ssd_loss_neg.1} parent=31 // pred_check_branch
        %928 = sbr.rel (%p926) target = $region64
      $region63: #{ssd_loss_neg.1} parent=31 // pred_region
        %s929 = smul.u32 4, %s14
      $region64: #{ssd_loss_neg.1} parent=31 // pred_fallthru
        _
    $region32: #{ssd_loss_neg.1} parent=5 // pred_fallthru
      _
    %p930 = scmp.le.s32.totalorder 2, %s9
    // Predicated region
    $region65: #{ssd_loss_neg.1} parent=5 // pred_check
      %p931 = pneg %p930
    $region66: #{ssd_loss_neg.1} parent=5 // pred_check_branch
      %933 = sbr.rel (%p931) target = $region68
    $region67: #{ssd_loss_neg.1} parent=5 // pred_region
      %s934 = ssub.s32 %s9, 2
      // Predicated region
      $region69: #{ssd_loss_neg.1} parent=67 // pred_check
        %p935 = pneg %p116
      $region70: #{ssd_loss_neg.1} parent=67 // pred_check_branch
        %937 = sbr.rel (%p935) target = $region72
      $region71: #{ssd_loss_neg.1} parent=67 // pred_region
        %s938 = smul.u32 4, %s15
        %p939 = scmp.lt.s32.totalorder %s938, 7
        %s940 = scalar_select %p939, %s938, 7
        %s941 = smul.addr %s940, 2
        %s942 = scalar_lea.vmem %s3, %s941
      $region72: #{ssd_loss_neg.1} parent=67 // pred_fallthru
        _
    $region68: #{ssd_loss_neg.1} parent=5 // pred_fallthru
      _
  $region6: #{ssd_loss_neg.1} parent=0 // loop_footer
    %s13 = sadd.s32 1, %s9
  $region7: #{ssd_loss_neg.1} parent=0 // loop_footer_branch
    %8 = sbr.rel target = $region3
  $region8: #{ssd_loss_neg.1} parent=0 // loop_exit
    _

</llo_original>
